<compile_context>
chip_gen: v6e
topology: v6e:2x2x1
jax: 0.10.0
libtpu: 0.0.40
codegen_flags: <defaults>
</compile_context>

<pallas_src>
import functools

import jax
import jax.numpy as jnp
from jax.experimental import pallas as pl
from jax.experimental.pallas import tpu as pltpu


def _round_up(x, m):
    return ((x + m - 1) // m) * m


# ----------------------------------- kernel -----------------------------------

def mff_kernel(f1_ref, f2_ref, f3_ref,
               lw1_ref, lb1_ref, lw2_ref, lb2_ref,
               gw1_ref, gb1_ref, gw2_ref, gb2_ref,
               out_ref,
               f_sc, pool_sc, glob_sc,
               *, inv_hw):
    # grid = (B, phase, HW tile);  blocks are (1, T, C); weights VMEM-resident.
    phase = pl.program_id(1)
    t = pl.program_id(2)
    n_hw = pl.num_programs(2)

    # ---------------- phase 0: build F, accumulate pooled sum ----------------
    @pl.when(phase == 0)
    def _accumulate():
        @pl.when(t == 0)
        def _init():
            pool_sc[...] = jnp.zeros_like(pool_sc)

        f = (f1_ref[0].astype(jnp.float32)
             + f2_ref[0].astype(jnp.float32)
             + f3_ref[0].astype(jnp.float32))                    # (T, C) f32
        f_sc[t] = f.astype(jnp.bfloat16)                         # per-batch F scratch
        pool_sc[...] += jnp.sum(f, axis=0, keepdims=True)        # (1, C) f32

        @pl.when(t == n_hw - 1)
        def _global_branch():
            # Tiny global MLP (conv1x1+BN folded).  Broadcast pooled row to 8
            # sublanes so both matmuls use an aligned M dimension.
            C = pool_sc.shape[1]
            pooled = jnp.broadcast_to(pool_sc[...] * inv_hw, (8, C))
            hg = jnp.dot(pooled, gw1_ref[...],
                         preferred_element_type=jnp.float32) + gb1_ref[...]
            hg = jnp.maximum(hg, 0.0)
            g = jnp.dot(hg, gw2_ref[...],
                        preferred_element_type=jnp.float32) + gb2_ref[...]
            glob_sc[...] = g[0:1, :]                             # (1, C) f32

    # ---------------- phase 1: local MLP + blend ------------------------------
    @pl.when(phase == 1)
    def _blend():
        f_bf = f_sc[t]                                           # (T, C) bf16, VMEM
        h = jnp.dot(f_bf, lw1_ref[...],
                    preferred_element_type=jnp.float32) + lb1_ref[...]
        h = jnp.maximum(h, 0.0)                                  # (T, Crp) f32
        local = jnp.dot(h.astype(jnp.bfloat16), lw2_ref[...],
                        preferred_element_type=jnp.float32) + lb2_ref[...]
        wei = jax.nn.sigmoid(local + glob_sc[...])               # (T, C) f32

        # F1*wei + F2*(1-wei) + F3*wei == F2 + (F - 2*F2) * wei
        f2 = f2_ref[0].astype(jnp.float32)
        out_ref[0] = (f2 + (f_bf.astype(jnp.float32) - 2.0 * f2) * wei
                      ).astype(out_ref.dtype)


# ----------------------------------- wrapper ----------------------------------

def mff_pallas(f1, f2, f3, params, *, tile_hw=None):
    """f1, f2, f3: (B, HW, C) channels-last flattened tensors (same shape/dtype)."""
    B, HW, C = f1.shape
    assert f2.shape == f1.shape and f3.shape == f1.shape
    dtype = f1.dtype
    lw1, lb1, lw2, lb2, gw1, gb1, gw2, gb2 = params
    Cr = lw1.shape[1]
    Crp = _round_up(Cr, 128)          # lane-dense hidden dim (zero pad is exact)

    def pad_hidden(w_in, b_in, w_out):
        return (jnp.pad(w_in, ((0, 0), (0, Crp - Cr))),
                jnp.pad(b_in, ((0, 0), (0, Crp - Cr))),
                jnp.pad(w_out, ((0, Crp - Cr), (0, 0))))

    lw1p, lb1p, lw2p = pad_hidden(lw1, lb1, lw2)
    gw1p, gb1p, gw2p = pad_hidden(gw1, gb1, gw2)

    # Local weights bf16 (native MXU rate, f32 accumulation); global weights
    # stay f32 (tiny, broadcast to every pixel, keeps the global path exact).
    lw1_bf = lw1p.astype(jnp.bfloat16)
    lw2_bf = lw2p.astype(jnp.bfloat16)
    lb1_f, lb2_f = lb1p.astype(jnp.float32), lb2.astype(jnp.float32)
    gw1_f, gw2_f = gw1p.astype(jnp.float32), gw2p.astype(jnp.float32)
    gb1_f, gb2_f = gb1p.astype(jnp.float32), gb2.astype(jnp.float32)

    itemsize = jnp.dtype(dtype).itemsize
    # F scratch is always bf16 -> keep the HW tile a multiple of 16 sublanes.
    sublane = 16

    # ---- generation-aware VMEM budget (v7x: 64 MiB/TC; v5e/v6e: 128 MiB) ----
    try:
        vmem_cap = int(getattr(pltpu.get_tpu_info(), "vmem_capacity_bytes",
                               64 << 20))
    except Exception:
        vmem_cap = 64 << 20                     # conservative (v7x per-core)
    budget = vmem_cap // 2                      # scoped cap: ~32 MiB on v7x

    weight_bytes = ((lw1_bf.size + lw2_bf.size) * 2
                    + (gw1_f.size + gw2_f.size) * 4
                    + (lb1_f.size + lb2_f.size + gb1_f.size + gb2_f.size) * 4)
    f_scratch_est = _round_up(HW, sublane) * C * 2          # bf16 F in VMEM

    # Per-HW-row VMEM need: 2x double-buffered (f1,f2,f3,out) blocks + ~6
    # block-sized f32 temporaries (h, local, wei, f2, F, product).
    per_row = C * (2 * 4 * itemsize + 6 * 4)
    avail = budget - weight_bytes - f_scratch_est - (4 << 20)   # 4 MiB headroom
    if avail < per_row * sublane:
        # TODO(synk): fall back to a two-pass HBM-streaming variant (write F
        # bf16 to HBM) when the per-batch F scratch exceeds the VMEM budget.
        raise ValueError("MFF: per-batch F scratch does not fit VMEM budget")

    if tile_hw is None:
        max_rows = min(avail // per_row,
                       (4 << 20) // max(1, C * itemsize))   # cap block ~4 MiB
        tile_hw = max(sublane, (max_rows // sublane) * sublane)
        tile_hw = min(tile_hw, _round_up(HW, sublane))
    assert tile_hw % sublane == 0, "tile_hw must be a multiple of 16"

    hw_pad = _round_up(HW, tile_hw)
    n_hw = hw_pad // tile_hw
    if hw_pad != HW:
        # Zero padding is exact: padded rows contribute 0 to the pooled sum
        # (we divide by the true HW) and are sliced off the output.
        pad = ((0, 0), (0, hw_pad - HW), (0, 0))
        f1, f2, f3 = jnp.pad(f1, pad), jnp.pad(f2, pad), jnp.pad(f3, pad)

    T = tile_hw

    # F1/F3: streamed in phase 0, index pinned in phase 1 -> no re-DMA.
    f_pin_spec = pl.BlockSpec(
        (1, T, C), lambda b, p, t: (b, t * (1 - p) + (n_hw - 1) * p, 0))
    # F2: re-read in phase 1 (the one extra stream of the 5-stream plan).
    f2_spec = pl.BlockSpec((1, T, C), lambda b, p, t: (b, t, 0))
    # Output: written in phase 1; pinned to block 0 during phase 0 so nothing
    # is flushed before it is written.
    out_spec = pl.BlockSpec((1, T, C), lambda b, p, t: (b, t * p, 0))
    # Constant block indices -> weights/biases stay VMEM-resident.
    w_spec = lambda shape: pl.BlockSpec(shape, lambda b, p, t: (0, 0))

    f_scratch_real = n_hw * T * C * 2 + 2 * C * 4
    vmem_need = (2 * 4 * T * C * itemsize       # double-buffered I/O blocks
                 + 6 * T * C * 4                # f32 temporaries
                 + f_scratch_real + weight_bytes + (2 << 20))
    vmem_limit = int(min(max(vmem_need, 16 << 20), budget))

    kernel = functools.partial(mff_kernel, inv_hw=1.0 / float(HW))

    out = pl.pallas_call(
        kernel,
        out_shape=jax.ShapeDtypeStruct((B, hw_pad, C), dtype),
        grid_spec=pltpu.PrefetchScalarGridSpec(
            num_scalar_prefetch=0,
            grid=(B, 2, n_hw),
            in_specs=[
                f_pin_spec, f2_spec, f_pin_spec,          # F1, F2, F3
                w_spec((C, Crp)), w_spec((1, Crp)),       # local conv1+BN1
                w_spec((Crp, C)), w_spec((1, C)),         # local conv2+BN2
                w_spec((C, Crp)), w_spec((1, Crp)),       # global conv1+BN1
                w_spec((Crp, C)), w_spec((1, C)),         # global conv2+BN2
            ],
            out_specs=out_spec,
            scratch_shapes=[
                pltpu.VMEM((n_hw, T, C), jnp.bfloat16),   # per-batch F
                pltpu.VMEM((1, C), jnp.float32),          # pooled-sum acc
                pltpu.VMEM((1, C), jnp.float32),          # global branch out
            ]),
        compiler_params=pltpu.CompilerParams(
            dimension_semantics=("parallel", "arbitrary", "arbitrary"),
            vmem_limit_bytes=vmem_limit),
    )(f1, f2, f3,
      lw1_bf, lb1_f, lw2_bf, lb2_f,
      gw1_f, gb1_f, gw2_f, gb2_f)

    return out[:, :HW, :] if hw_pad != HW else out


# ----------------------------- parameter setup -------------------------------

def fold_conv_bn(w, b_conv, gamma, beta, mean, var, eps=1e-5):
    """Fold 1x1 conv (as (Cin, Cout) matrix + bias) with inference BatchNorm."""
    scale = gamma / jnp.sqrt(var + eps)               # (Cout,)
    w_eff = w * scale[None, :]                        # (Cin, Cout)
    b_eff = (b_conv - mean) * scale + beta            # (Cout,)
    return w_eff.astype(jnp.float32), b_eff[None, :].astype(jnp.float32)


def make_params(key, channels, r):
    inter = channels // r
    keys = jax.random.split(key, 24)

    def conv_bn(ks, cin, cout):
        w = jax.random.normal(ks[0], (cin, cout), jnp.float32) * 0.05
        b = jax.random.normal(ks[1], (cout,), jnp.float32) * 0.05
        gamma = 1.0 + 0.1 * jax.random.normal(ks[2], (cout,), jnp.float32)
        beta = 0.1 * jax.random.normal(ks[3], (cout,), jnp.float32)
        mean = 0.1 * jax.random.normal(ks[4], (cout,), jnp.float32)
        var = jnp.abs(jax.random.normal(ks[5], (cout,), jnp.float32)) + 0.5
        return fold_conv_bn(w, b, gamma, beta, mean, var)

    lw1, lb1 = conv_bn(keys[0:6], channels, inter)     # local conv1 + BN1
    lw2, lb2 = conv_bn(keys[6:12], inter, channels)    # local conv2 + BN2
    gw1, gb1 = conv_bn(keys[12:18], channels, inter)   # global conv1 + BN1
    gw2, gb2 = conv_bn(keys[18:24], inter, channels)   # global conv2 + BN2
    return (lw1, lb1, lw2, lb2, gw1, gb1, gw2, gb2)


def mff_reference(f1, f2, f3, params):
    """Pure-JAX f32 reference on (B, HW, C) tensors."""
    lw1, lb1, lw2, lb2, gw1, gb1, gw2, gb2 = params
    f = f1 + f2 + f3
    local = jnp.maximum(f @ lw1 + lb1, 0.0) @ lw2 + lb2
    pooled = f.mean(axis=1, keepdims=True)
    glob = jnp.maximum(pooled @ gw1 + gb1, 0.0) @ gw2 + gb2
    wei = jax.nn.sigmoid(local + glob)
    return f1 * wei + f2 * (1.0 - wei) + f3 * wei


# ----------------------------------- main -------------------------------------

if __name__ == "__main__":
    # C=128 keeps the last dim lane-dense; real model channels (512) are
    # multiples of 128 as well.
    B, C, H, W = 2, 128, 16, 16
    r = 8

    key = jax.random.PRNGKey(0)
    k1, k2, k3, kp = jax.random.split(key, 4)

    # Inputs in PyTorch NCHW convention.
    F1_nchw = jax.random.normal(k1, (B, C, H, W), jnp.float32)
    F2_nchw = jax.random.normal(k2, (B, C, H, W), jnp.float32)
    F3_nchw = jax.random.normal(k3, (B, C, H, W), jnp.float32)

    params = make_params(kp, C, r)

    # NCHW -> (B, H*W, C) channels-last, streamed as bf16 (review item 1).
    def to_kernel_layout(x):
        return jnp.transpose(x, (0, 2, 3, 1)).reshape(B, H * W, C).astype(jnp.bfloat16)

    def to_nchw(x):
        return jnp.transpose(x.reshape(B, H, W, C), (0, 3, 1, 2))

    f1 = to_kernel_layout(F1_nchw)
    f2 = to_kernel_layout(F2_nchw)
    f3 = to_kernel_layout(F3_nchw)

    # tile_hw=64 exercises the tiled (B, 2, HW//T) grid (grid = (2, 2, 4)).
    out = mff_pallas(f1, f2, f3, params, tile_hw=64)
    out = jax.block_until_ready(out)

    # Reference in f32 (from the same bf16-quantized inputs); kernel uses bf16
    # streams / bf16 F scratch with f32 accumulation, so allow modest tolerance.
    ref = mff_reference(f1.astype(jnp.float32), f2.astype(jnp.float32),
                        f3.astype(jnp.float32), params)
    assert jnp.allclose(out.astype(jnp.float32), ref, atol=8e-2, rtol=5e-2), \
        "mismatch vs reference"

    out_nchw = to_nchw(out)  # back to PyTorch NCHW convention
    jax.block_until_ready(out_nchw)
    print("KERNEL_OK")
</pallas_src>

<mosaic_0001>
module attributes {stable_mosaic.version = 11 : i64} {
  func.func @mff_kernel(%arg0: i32, %arg1: i32, %arg2: i32, %arg3: memref<1x64x128xbf16, #tpu.memory_space<vmem>>, %arg4: memref<1x64x128xbf16, #tpu.memory_space<vmem>>, %arg5: memref<1x64x128xbf16, #tpu.memory_space<vmem>>, %arg6: memref<128x128xbf16, #tpu.memory_space<vmem>>, %arg7: memref<1x128xf32, #tpu.memory_space<vmem>>, %arg8: memref<128x128xbf16, #tpu.memory_space<vmem>>, %arg9: memref<1x128xf32, #tpu.memory_space<vmem>>, %arg10: memref<128x128xf32, #tpu.memory_space<vmem>>, %arg11: memref<1x128xf32, #tpu.memory_space<vmem>>, %arg12: memref<128x128xf32, #tpu.memory_space<vmem>>, %arg13: memref<1x128xf32, #tpu.memory_space<vmem>>, %arg14: memref<1x64x128xbf16, #tpu.memory_space<vmem>>, %arg15: memref<4x64x128xbf16, #tpu.memory_space<vmem>>, %arg16: memref<1x128xf32, #tpu.memory_space<vmem>>, %arg17: memref<1x128xf32, #tpu.memory_space<vmem>>) attributes {dimension_semantics = [#tpu.dimension_semantics<parallel>, #tpu.dimension_semantics<arbitrary>, #tpu.dimension_semantics<arbitrary>], iteration_bounds = array<i64: 2, 2, 4>, scalar_prefetch = 0 : i64, scratch_operands = 3 : i64, tpu.core_type = #tpu.core_type<tc>, window_params = [{transform_indices = @transform_0, window_bounds = array<i64: 1, 64, 128>}, {transform_indices = @transform_1, window_bounds = array<i64: 1, 64, 128>}, {transform_indices = @transform_2, window_bounds = array<i64: 1, 64, 128>}, {pipeline_mode = #tpu.pipeline_mode<synchronous>, transform_indices = @transform_3, window_bounds = array<i64: 128, 128>}, {pipeline_mode = #tpu.pipeline_mode<synchronous>, transform_indices = @transform_4, window_bounds = array<i64: 1, 128>}, {pipeline_mode = #tpu.pipeline_mode<synchronous>, transform_indices = @transform_5, window_bounds = array<i64: 128, 128>}, {pipeline_mode = #tpu.pipeline_mode<synchronous>, transform_indices = @transform_6, window_bounds = array<i64: 1, 128>}, {pipeline_mode = #tpu.pipeline_mode<synchronous>, transform_indices = @transform_7, window_bounds = array<i64: 128, 128>}, {pipeline_mode = #tpu.pipeline_mode<synchronous>, transform_indices = @transform_8, window_bounds = array<i64: 1, 128>}, {pipeline_mode = #tpu.pipeline_mode<synchronous>, transform_indices = @transform_9, window_bounds = array<i64: 128, 128>}, {pipeline_mode = #tpu.pipeline_mode<synchronous>, transform_indices = @transform_10, window_bounds = array<i64: 1, 128>}, {transform_indices = @transform_11, window_bounds = array<i64: 1, 64, 128>}]} {
    %c0_i32 = arith.constant 0 : i32
    %0 = arith.cmpi eq, %arg1, %c0_i32 : i32
    %1 = arith.extui %0 : i1 to i32
    %c0_i32_0 = arith.constant 0 : i32
    %2 = arith.cmpi ne, %1, %c0_i32_0 : i32
    scf.if %2 {
      %c0_i32_2 = arith.constant 0 : i32
      %6 = arith.cmpi eq, %arg2, %c0_i32_2 : i32
      %7 = arith.extui %6 : i1 to i32
      %c0_i32_3 = arith.constant 0 : i32
      %8 = arith.cmpi ne, %7, %c0_i32_3 : i32
      scf.if %8 {
        %cst_19 = arith.constant 0.000000e+00 : f32
        %33 = vector.broadcast %cst_19 : f32 to vector<1x128xf32>
        %c0_20 = arith.constant 0 : index
        %c0_21 = arith.constant 0 : index
        %34 = vector.load %arg16[%c0_20, %c0_21] : memref<1x128xf32, #tpu.memory_space<vmem>>, vector<1x128xf32>
        tpu.vector_store %arg16[%c0_20, %c0_21], %33 {strides = array<i32>} : memref<1x128xf32, #tpu.memory_space<vmem>>, vector<1x128xf32>,
      } else {
      }
      %c0 = arith.constant 0 : index
      %c0_4 = arith.constant 0 : index
      %c0_5 = arith.constant 0 : index
      %9 = vector.load %arg3[%c0, %c0_4, %c0_5] : memref<1x64x128xbf16, #tpu.memory_space<vmem>>, vector<1x64x128xbf16>
      %10 = vector.shape_cast %9 : vector<1x64x128xbf16> to vector<64x128xbf16>
      %11 = arith.extf %10 : vector<64x128xbf16> to vector<64x128xf32>
      %c0_6 = arith.constant 0 : index
      %c0_7 = arith.constant 0 : index
      %c0_8 = arith.constant 0 : index
      %12 = vector.load %arg4[%c0_6, %c0_7, %c0_8] : memref<1x64x128xbf16, #tpu.memory_space<vmem>>, vector<1x64x128xbf16>
      %13 = vector.shape_cast %12 : vector<1x64x128xbf16> to vector<64x128xbf16>
      %14 = arith.extf %13 : vector<64x128xbf16> to vector<64x128xf32>
      %15 = arith.addf %11, %14 : vector<64x128xf32>
      %c0_9 = arith.constant 0 : index
      %c0_10 = arith.constant 0 : index
      %c0_11 = arith.constant 0 : index
      %16 = vector.load %arg5[%c0_9, %c0_10, %c0_11] : memref<1x64x128xbf16, #tpu.memory_space<vmem>>, vector<1x64x128xbf16>
      %17 = vector.shape_cast %16 : vector<1x64x128xbf16> to vector<64x128xbf16>
      %18 = arith.extf %17 : vector<64x128xbf16> to vector<64x128xf32>
      %19 = arith.addf %15, %18 : vector<64x128xf32>
      %20 = arith.truncf %19 : vector<64x128xf32> to vector<64x128xbf16>
      %21 = arith.index_cast %arg2 : i32 to index
      %c0_12 = arith.constant 0 : index
      %c0_13 = arith.constant 0 : index
      %22 = vector.load %arg15[%21, %c0_12, %c0_13] : memref<4x64x128xbf16, #tpu.memory_space<vmem>>, vector<1x64x128xbf16>
      %23 = vector.shape_cast %22 : vector<1x64x128xbf16> to vector<64x128xbf16>
      %24 = vector.shape_cast %20 : vector<64x128xbf16> to vector<1x64x128xbf16>
      tpu.vector_store %arg15[%21, %c0_12, %c0_13], %24 {strides = array<i32>} : memref<4x64x128xbf16, #tpu.memory_space<vmem>>, vector<1x64x128xbf16>,
      %c0_14 = arith.constant 0 : index
      %c0_15 = arith.constant 0 : index
      %25 = vector.load %arg16[%c0_14, %c0_15] : memref<1x128xf32, #tpu.memory_space<vmem>>, vector<1x128xf32>
      %cst = arith.constant dense<0.000000e+00> : vector<128xf32>
      %26 = vector.multi_reduction <add>, %19, %cst [0] : vector<64x128xf32> to vector<128xf32>
      %27 = vector.shape_cast %26 : vector<128xf32> to vector<1x128xf32>
      %28 = arith.addf %25, %27 : vector<1x128xf32>
      %c0_16 = arith.constant 0 : index
      %c0_17 = arith.constant 0 : index
      %29 = vector.load %arg16[%c0_16, %c0_17] : memref<1x128xf32, #tpu.memory_space<vmem>>, vector<1x128xf32>
      tpu.vector_store %arg16[%c0_16, %c0_17], %28 {strides = array<i32>} : memref<1x128xf32, #tpu.memory_space<vmem>>, vector<1x128xf32>,
      %c3_i32 = arith.constant 3 : i32
      %30 = arith.cmpi eq, %arg2, %c3_i32 : i32
      %31 = arith.extui %30 : i1 to i32
      %c0_i32_18 = arith.constant 0 : i32
      %32 = arith.cmpi ne, %31, %c0_i32_18 : i32
      scf.if %32 {
        %c0_19 = arith.constant 0 : index
        %c0_20 = arith.constant 0 : index
        %33 = vector.load %arg16[%c0_19, %c0_20] : memref<1x128xf32, #tpu.memory_space<vmem>>, vector<1x128xf32>
        %cst_21 = arith.constant 3.906250e-03 : f32
        %34 = vector.broadcast %cst_21 : f32 to vector<1x128xf32>
        %35 = arith.mulf %33, %34 : vector<1x128xf32>
        %36 = vector.shape_cast %35 : vector<1x128xf32> to vector<1x128xf32>
        %37 = vector.broadcast %36 : vector<1x128xf32> to vector<8x128xf32>
        %c0_22 = arith.constant 0 : index
        %c0_23 = arith.constant 0 : index
        %38 = vector.load %arg10[%c0_22, %c0_23] : memref<128x128xf32, #tpu.memory_space<vmem>>, vector<128x128xf32>
        %cst_24 = arith.constant dense<0.000000e+00> : vector<8x128xf32>
        %39 = tpu.matmul %37, %38, %cst_24 {dimension_numbers = #tpu.dot_dimension_numbers<[1], [0], [0], [1], [0, 0, 1, 1], [], []>} : vector<8x128xf32>, vector<128x128xf32>, vector<8x128xf32> -> vector<8x128xf32>
        %c0_25 = arith.constant 0 : index
        %c0_26 = arith.constant 0 : index
        %40 = vector.load %arg11[%c0_25, %c0_26] : memref<1x128xf32, #tpu.memory_space<vmem>>, vector<1x128xf32>
        %41 = vector.broadcast %40 : vector<1x128xf32> to vector<8x128xf32>
        %42 = arith.addf %39, %41 : vector<8x128xf32>
        %cst_27 = arith.constant 0.000000e+00 : f32
        %43 = vector.broadcast %cst_27 : f32 to vector<8x128xf32>
        %44 = arith.maximumf %42, %43 : vector<8x128xf32>
        %c0_28 = arith.constant 0 : index
        %c0_29 = arith.constant 0 : index
        %45 = vector.load %arg12[%c0_28, %c0_29] : memref<128x128xf32, #tpu.memory_space<vmem>>, vector<128x128xf32>
        %cst_30 = arith.constant dense<0.000000e+00> : vector<8x128xf32>
        %46 = tpu.matmul %44, %45, %cst_30 {dimension_numbers = #tpu.dot_dimension_numbers<[1], [0], [0], [1], [0, 0, 1, 1], [], []>} : vector<8x128xf32>, vector<128x128xf32>, vector<8x128xf32> -> vector<8x128xf32>
        %c0_31 = arith.constant 0 : index
        %c0_32 = arith.constant 0 : index
        %47 = vector.load %arg13[%c0_31, %c0_32] : memref<1x128xf32, #tpu.memory_space<vmem>>, vector<1x128xf32>
        %48 = vector.broadcast %47 : vector<1x128xf32> to vector<8x128xf32>
        %49 = arith.addf %46, %48 : vector<8x128xf32>
        %50 = vector.extract_strided_slice %49 {offsets = [0, 0], sizes = [1, 128], strides = [1, 1]} : vector<8x128xf32> to vector<1x128xf32>
        %c0_33 = arith.constant 0 : index
        %c0_34 = arith.constant 0 : index
        %51 = vector.load %arg17[%c0_33, %c0_34] : memref<1x128xf32, #tpu.memory_space<vmem>>, vector<1x128xf32>
        tpu.vector_store %arg17[%c0_33, %c0_34], %50 {strides = array<i32>} : memref<1x128xf32, #tpu.memory_space<vmem>>, vector<1x128xf32>,
      } else {
      }
    } else {
    }
    %c1_i32 = arith.constant 1 : i32
    %3 = arith.cmpi eq, %arg1, %c1_i32 : i32
    %4 = arith.extui %3 : i1 to i32
    %c0_i32_1 = arith.constant 0 : i32
    %5 = arith.cmpi ne, %4, %c0_i32_1 : i32
    scf.if %5 {
      %6 = arith.index_cast %arg2 : i32 to index
      %c0 = arith.constant 0 : index
      %c0_2 = arith.constant 0 : index
      %7 = vector.load %arg15[%6, %c0, %c0_2] : memref<4x64x128xbf16, #tpu.memory_space<vmem>>, vector<1x64x128xbf16>
      %8 = vector.shape_cast %7 : vector<1x64x128xbf16> to vector<64x128xbf16>
      %c0_3 = arith.constant 0 : index
      %c0_4 = arith.constant 0 : index
      %9 = vector.load %arg6[%c0_3, %c0_4] : memref<128x128xbf16, #tpu.memory_space<vmem>>, vector<128x128xbf16>
      %cst = arith.constant dense<0.000000e+00> : vector<64x128xf32>
      %10 = tpu.matmul %8, %9, %cst {dimension_numbers = #tpu.dot_dimension_numbers<[1], [0], [0], [1], [0, 0, 1, 1], [], []>} : vector<64x128xbf16>, vector<128x128xbf16>, vector<64x128xf32> -> vector<64x128xf32>
      %c0_5 = arith.constant 0 : index
      %c0_6 = arith.constant 0 : index
      %11 = vector.load %arg7[%c0_5, %c0_6] : memref<1x128xf32, #tpu.memory_space<vmem>>, vector<1x128xf32>
      %12 = vector.broadcast %11 : vector<1x128xf32> to vector<64x128xf32>
      %13 = arith.addf %10, %12 : vector<64x128xf32>
      %cst_7 = arith.constant 0.000000e+00 : f32
      %14 = vector.broadcast %cst_7 : f32 to vector<64x128xf32>
      %15 = arith.maximumf %13, %14 : vector<64x128xf32>
      %16 = arith.truncf %15 : vector<64x128xf32> to vector<64x128xbf16>
      %c0_8 = arith.constant 0 : index
      %c0_9 = arith.constant 0 : index
      %17 = vector.load %arg8[%c0_8, %c0_9] : memref<128x128xbf16, #tpu.memory_space<vmem>>, vector<128x128xbf16>
      %cst_10 = arith.constant dense<0.000000e+00> : vector<64x128xf32>
      %18 = tpu.matmul %16, %17, %cst_10 {dimension_numbers = #tpu.dot_dimension_numbers<[1], [0], [0], [1], [0, 0, 1, 1], [], []>} : vector<64x128xbf16>, vector<128x128xbf16>, vector<64x128xf32> -> vector<64x128xf32>
      %c0_11 = arith.constant 0 : index
      %c0_12 = arith.constant 0 : index
      %19 = vector.load %arg9[%c0_11, %c0_12] : memref<1x128xf32, #tpu.memory_space<vmem>>, vector<1x128xf32>
      %20 = vector.broadcast %19 : vector<1x128xf32> to vector<64x128xf32>
      %21 = arith.addf %18, %20 : vector<64x128xf32>
      %c0_13 = arith.constant 0 : index
      %c0_14 = arith.constant 0 : index
      %22 = vector.load %arg17[%c0_13, %c0_14] : memref<1x128xf32, #tpu.memory_space<vmem>>, vector<1x128xf32>
      %23 = vector.broadcast %22 : vector<1x128xf32> to vector<64x128xf32>
      %24 = arith.addf %21, %23 : vector<64x128xf32>
      %25 = arith.negf %24 : vector<64x128xf32>
      %26 = math.exp %25 : vector<64x128xf32>
      %cst_15 = arith.constant 1.000000e+00 : f32
      %27 = vector.broadcast %cst_15 : f32 to vector<64x128xf32>
      %28 = arith.addf %27, %26 : vector<64x128xf32>
      %29 = arith.divf %27, %28 : vector<64x128xf32>
      %c0_16 = arith.constant 0 : index
      %c0_17 = arith.constant 0 : index
      %c0_18 = arith.constant 0 : index
      %30 = vector.load %arg4[%c0_16, %c0_17, %c0_18] : memref<1x64x128xbf16, #tpu.memory_space<vmem>>, vector<1x64x128xbf16>
      %31 = vector.shape_cast %30 : vector<1x64x128xbf16> to vector<64x128xbf16>
      %32 = arith.extf %31 : vector<64x128xbf16> to vector<64x128xf32>
      %33 = arith.extf %8 : vector<64x128xbf16> to vector<64x128xf32>
      %cst_19 = arith.constant 2.000000e+00 : f32
      %34 = vector.broadcast %cst_19 : f32 to vector<64x128xf32>
      %35 = arith.mulf %34, %32 : vector<64x128xf32>
      %36 = arith.subf %33, %35 : vector<64x128xf32>
      %37 = arith.mulf %36, %29 : vector<64x128xf32>
      %38 = arith.addf %32, %37 : vector<64x128xf32>
      %39 = arith.truncf %38 : vector<64x128xf32> to vector<64x128xbf16>
      %c0_20 = arith.constant 0 : index
      %c0_21 = arith.constant 0 : index
      %c0_22 = arith.constant 0 : index
      %40 = vector.load %arg14[%c0_20, %c0_21, %c0_22] : memref<1x64x128xbf16, #tpu.memory_space<vmem>>, vector<1x64x128xbf16>
      %41 = vector.shape_cast %40 : vector<1x64x128xbf16> to vector<64x128xbf16>
      %42 = vector.shape_cast %39 : vector<64x128xbf16> to vector<1x64x128xbf16>
      tpu.vector_store %arg14[%c0_20, %c0_21, %c0_22], %42 {strides = array<i32>} : memref<1x64x128xbf16, #tpu.memory_space<vmem>>, vector<1x64x128xbf16>,
    } else {
    }
    return
  }
  func.func @transform_0(%arg0: i32, %arg1: i32, %arg2: i32) -> (i32, i32, i32) {
    %c1_i32 = arith.constant 1 : i32
    %0 = arith.subi %c1_i32, %arg1 : i32
    %1 = arith.muli %arg2, %0 : i32
    %c3_i32 = arith.constant 3 : i32
    %2 = arith.muli %c3_i32, %arg1 : i32
    %3 = arith.addi %1, %2 : i32
    %c0_i32 = arith.constant 0 : i32
    %c0_i32_0 = arith.constant 0 : i32
    return %arg0, %3, %c0_i32 : i32, i32, i32
  }
  func.func @transform_1(%arg0: i32, %arg1: i32, %arg2: i32) -> (i32, i32, i32) {
    %c0_i32 = arith.constant 0 : i32
    %c0_i32_0 = arith.constant 0 : i32
    return %arg0, %arg2, %c0_i32 : i32, i32, i32
  }
  func.func @transform_2(%arg0: i32, %arg1: i32, %arg2: i32) -> (i32, i32, i32) {
    %c1_i32 = arith.constant 1 : i32
    %0 = arith.subi %c1_i32, %arg1 : i32
    %1 = arith.muli %arg2, %0 : i32
    %c3_i32 = arith.constant 3 : i32
    %2 = arith.muli %c3_i32, %arg1 : i32
    %3 = arith.addi %1, %2 : i32
    %c0_i32 = arith.constant 0 : i32
    %c0_i32_0 = arith.constant 0 : i32
    return %arg0, %3, %c0_i32 : i32, i32, i32
  }
  func.func @transform_3(%arg0: i32, %arg1: i32, %arg2: i32) -> (i32, i32) {
    %c0_i32 = arith.constant 0 : i32
    %c0_i32_0 = arith.constant 0 : i32
    %c0_i32_1 = arith.constant 0 : i32
    return %c0_i32, %c0_i32_0 : i32, i32
  }
  func.func @transform_4(%arg0: i32, %arg1: i32, %arg2: i32) -> (i32, i32) {
    %c0_i32 = arith.constant 0 : i32
    %c0_i32_0 = arith.constant 0 : i32
    %c0_i32_1 = arith.constant 0 : i32
    return %c0_i32, %c0_i32_0 : i32, i32
  }
  func.func @transform_5(%arg0: i32, %arg1: i32, %arg2: i32) -> (i32, i32) {
    %c0_i32 = arith.constant 0 : i32
    %c0_i32_0 = arith.constant 0 : i32
    %c0_i32_1 = arith.constant 0 : i32
    return %c0_i32, %c0_i32_0 : i32, i32
  }
  func.func @transform_6(%arg0: i32, %arg1: i32, %arg2: i32) -> (i32, i32) {
    %c0_i32 = arith.constant 0 : i32
    %c0_i32_0 = arith.constant 0 : i32
    %c0_i32_1 = arith.constant 0 : i32
    return %c0_i32, %c0_i32_0 : i32, i32
  }
  func.func @transform_7(%arg0: i32, %arg1: i32, %arg2: i32) -> (i32, i32) {
    %c0_i32 = arith.constant 0 : i32
    %c0_i32_0 = arith.constant 0 : i32
    %c0_i32_1 = arith.constant 0 : i32
    return %c0_i32, %c0_i32_0 : i32, i32
  }
  func.func @transform_8(%arg0: i32, %arg1: i32, %arg2: i32) -> (i32, i32) {
    %c0_i32 = arith.constant 0 : i32
    %c0_i32_0 = arith.constant 0 : i32
    %c0_i32_1 = arith.constant 0 : i32
    return %c0_i32, %c0_i32_0 : i32, i32
  }
  func.func @transform_9(%arg0: i32, %arg1: i32, %arg2: i32) -> (i32, i32) {
    %c0_i32 = arith.constant 0 : i32
    %c0_i32_0 = arith.constant 0 : i32
    %c0_i32_1 = arith.constant 0 : i32
    return %c0_i32, %c0_i32_0 : i32, i32
  }
  func.func @transform_10(%arg0: i32, %arg1: i32, %arg2: i32) -> (i32, i32) {
    %c0_i32 = arith.constant 0 : i32
    %c0_i32_0 = arith.constant 0 : i32
    %c0_i32_1 = arith.constant 0 : i32
    return %c0_i32, %c0_i32_0 : i32, i32
  }
  func.func @transform_11(%arg0: i32, %arg1: i32, %arg2: i32) -> (i32, i32, i32) {
    %0 = arith.muli %arg2, %arg1 : i32
    %c0_i32 = arith.constant 0 : i32
    %c0_i32_0 = arith.constant 0 : i32
    return %arg0, %0, %c0_i32 : i32, i32, i32
  }
}

</mosaic_0001>

<llo_original>
// kernel: tpu_custom_call.1
$region0: #{tpu_custom_call.1}
  #allocation0 [shape = 'u32[]', space=smem, size = 0x4, offset = 0x4, fixed_abs, tag = 'smem constant byte address 0x4 - core index']
  #allocation1 [shape = 'u32[144,128]{1,0:T(1,128)}', space=vmem, size = 0x12000, scoped, tag = 'internal scratch']
  #allocation2 [shape = 'bf16[4,64,128]{2,1,0:T(8,128)(2,1)}', space=vmem, size = 0x10000, scoped, tag = 'scratch operand']
  #allocation3 [shape = 'f32[1,128]{1,0:T(1,128)}', space=vmem, size = 0x200, scoped, tag = 'scratch operand']
  #allocation4 [shape = 'f32[1,128]{1,0:T(1,128)}', space=vmem, size = 0x200, scoped, tag = 'scratch operand']
  %s0 = inlined_call_operand.hbm [shape: bf16[2,256,128], index: 0, kind: input, shape index: {}]
  %s1 = inlined_call_operand.hbm [shape: bf16[2,256,128], index: 1, kind: input, shape index: {}]
  %s2 = inlined_call_operand.hbm [shape: bf16[2,256,128], index: 2, kind: input, shape index: {}]
  %s3 = inlined_call_operand.hbm [shape: bf16[128,128], index: 3, kind: input, shape index: {}]
  %s4 = inlined_call_operand.vmem [shape: f32[1,128], index: 4, kind: input, shape index: {}]
  %s5 = inlined_call_operand.hbm [shape: bf16[128,128], index: 5, kind: input, shape index: {}]
  %s6 = inlined_call_operand.vmem [shape: f32[1,128], index: 6, kind: input, shape index: {}]
  %s7 = inlined_call_operand.hbm [shape: f32[128,128], index: 7, kind: input, shape index: {}]
  %s8 = inlined_call_operand.vmem [shape: f32[1,128], index: 8, kind: input, shape index: {}]
  %s9 = inlined_call_operand.hbm [shape: f32[128,128], index: 9, kind: input, shape index: {}]
  %s10 = inlined_call_operand.vmem [shape: f32[1,128], index: 10, kind: input, shape index: {}]
  %s11 = inlined_call_operand.hbm [shape: bf16[2,256,128], index: 11, kind: output, shape index: {}]
  %s12 = sld [smem:[#allocation0]]
  $region121: #{tpu_custom_call.1} parent=0
    _
  %s14 = ssub.s32 1, %s12
  %s15 = scalar_select 0, %s14, %s12
  $region1: #{tpu_custom_call.1} parent=0
    #allocation5 [shape = 'u8[32768]{0}', space=vmem, size = 0x8000, scoped, tag = 'input window, operand 0']
    #allocation6 [shape = 's32[2]{0}', space=sflag, size = 0x8, scoped, tag = 'scoped memory for tpu_custom_call.1']
    #allocation7 [shape = 's32[2]{0}', space=sflag, size = 0x8, scoped, tag = 'scoped memory for tpu_custom_call.1']
    #allocation8 [shape = 'u8[32768]{0}', space=vmem, size = 0x8000, scoped, tag = 'input window, operand 1']
    #allocation9 [shape = 's32[2]{0}', space=sflag, size = 0x8, scoped, tag = 'scoped memory for tpu_custom_call.1']
    #allocation10 [shape = 'u8[32768]{0}', space=vmem, size = 0x8000, scoped, tag = 'input window, operand 2']
    #allocation11 [shape = 'u8[32768]{0}', space=vmem, size = 0x8000, scoped, tag = 'input window, operand 3, single buffered']
    #allocation12 [shape = 's32[1]{0}', space=sflag, size = 0x4, scoped, tag = 'scoped memory for tpu_custom_call.1']
    #allocation13 [shape = 'u8[32768]{0}', space=vmem, size = 0x8000, scoped, tag = 'input window, operand 5, single buffered']
    #allocation14 [shape = 'u8[65536]{0}', space=vmem, size = 0x10000, scoped, tag = 'input window, operand 7, single buffered']
    #allocation15 [shape = 's32[1]{0}', space=sflag, size = 0x4, scoped, tag = 'scoped memory for tpu_custom_call.1']
    #allocation16 [shape = 'u8[65536]{0}', space=vmem, size = 0x10000, scoped, tag = 'input window, operand 9, single buffered']
    #allocation17 [shape = 'u8[32768]{0}', space=vmem, size = 0x8000, scoped, tag = 'output window, operand 0']
    %16 = vsyncpa [#allocation6], 0
    %s17 = scalar_lea.sflag [#allocation6], 1
    %18 = vsyncpa %s17, 0
    %19 = vsyncpa [#allocation9], 0
    %s20 = scalar_lea.sflag [#allocation9], 1
    %21 = vsyncpa %s20, 0
    %22 = vsyncpa [#allocation12], 0
    %23 = vsyncpa [#allocation15], 0
    %24 = vsyncpa [#allocation7], 0
    %s25 = scalar_lea.sflag [#allocation7], 1
    %26 = vsyncpa %s25, 0
    loop: start=0, step=1, limit=18
    $region2: #{tpu_custom_call.1} parent=1 // loop_pre_header
      _
    $region3: #{tpu_custom_call.1} parent=1 // loop_header
      %s28 = sphi 0, %s32
      %p29 = scmp.ge.s32.totalorder %s28, 18
      %s35 = sphi 0, %s54
      %s36 = sphi 0, %s50
      %s37 = sphi 0, %s46
      %s38 = sphi 0, %s35
      %s39 = sphi 0, %s36
      %s40 = sphi 0, %s37
      %s41 = sphi 0, %s38
      %s42 = sphi 0, %s39
      %s43 = sphi 0, %s40
      %s67 = sphi 0, %s69
      %s70 = sphi 0, %s67
      %s71 = sphi 0, %s70
      %s87 = sphi 0, %s71
      %s95 = sphi 0, %s97
      %s98 = sphi 0, %s95
      %s99 = sphi 0, %s98
      %s115 = sphi 0, %s99
      %s131 = sphi 0, %s133
      %s134 = sphi 0, %s131
      %s135 = sphi 0, %s134
      %s151 = sphi 0, %s135
      %s155 = sphi 0, %s155
      %s157 = sphi 0, %s155
      %s158 = sphi 0, %s157
      %s172 = sphi 0, %s158
      %s176 = sphi 0, %s176
      %s178 = sphi 0, %s176
      %s179 = sphi 0, %s178
      %s193 = sphi 0, %s179
      %s197 = sphi 0, %s197
      %s199 = sphi 0, %s197
      %s200 = sphi 0, %s199
      %s214 = sphi 0, %s200
      %s218 = sphi 0, %s218
      %s220 = sphi 0, %s218
      %s221 = sphi 0, %s220
      %s235 = sphi 0, %s221
      %s239 = sphi 0, %s239
      %s241 = sphi 0, %s239
      %s242 = sphi 0, %s241
      %s256 = sphi 0, %s242
      %s260 = sphi 0, %s260
      %s262 = sphi 0, %s260
      %s263 = sphi 0, %s262
      %s277 = sphi 0, %s263
      %s281 = sphi 0, %s281
      %s283 = sphi 0, %s281
      %s284 = sphi 0, %s283
      %s298 = sphi 0, %s284
      %s302 = sphi 0, %s302
      %s304 = sphi 0, %s302
      %s305 = sphi 0, %s304
      %s319 = sphi 0, %s305
      %s329 = sphi 0, %s331
      %s332 = sphi 0, %s329
      %s333 = sphi 0, %s332
      %s349 = sphi 0, %s333
    $region4: #{tpu_custom_call.1} parent=1 // loop_header_branch
      %31 = sbr.rel (%p29) target = $region8
    $region5: #{tpu_custom_call.1} parent=1 // loop_body
      %s33 = ssub.s32 %s28, 1
      %s34 = ssub.s32 %s28, 2
      %s44 = sadd.s32 1, %s37
      %p45 = scmp.ge.s32.totalorder %s44, 4
      %s46 = scalar_select %p45, 0, %s44
      %s47 = sadd.s32 1, %s36
      %s48 = scalar_select %p45, %s47, %s36
      %p49 = scmp.ge.s32.totalorder %s48, 2
      %s50 = scalar_select %p49, 0, %s48
      %s51 = sadd.s32 1, %s35
      %s52 = scalar_select %p49, %s51, %s35
      %p53 = scmp.ge.s32.totalorder %s52, 2
      %s54 = scalar_select %p53, 0, %s52
      %s55 = ssub.s32 1, %s36
      %s56 = smul.u32 %s37, %s55
      %s57 = smul.u32 %s36, 3
      %s58 = sadd.s32 %s56, %s57
      %s59 = ssub.s32 1, %s50
      %s60 = smul.u32 %s46, %s59
      %s61 = smul.u32 %s50, 3
      %s62 = sadd.s32 %s60, %s61
      %s63 = ssub.s32 %s35, %s54
      %s64 = ssub.s32 %s58, %s62
      %s65 = sor.u32 %s63, %s64
      %p66 = scmp.eq.s32.totalorder %s65, 0
      %s68 = sadd.s32 %s67, 1
      %s69 = scalar_select %p66, %s67, %s68
      %p72 = pneg %p66
      %p73 = scmp.eq.s32.totalorder %s28, 15
      %p74 = por %p72, %p73
      %p75 = scmp.ne.s32.totalorder %s67, %s70
      %p76 = scmp.eq.s32.totalorder %s28, 0
      %p77 = por %p75, %p76
      %p78 = scmp.ne.s32.totalorder %s67, %s70
      %p79 = scmp.eq.s32.totalorder %s33, 15
      %p80 = por %p78, %p79
      %p81 = scmp.ne.s32.totalorder %s70, %s71
      %p82 = scmp.eq.s32.totalorder %s33, 0
      %p83 = por %p81, %p82
      %p84 = scmp.ne.s32.totalorder %s70, %s71
      %p85 = scmp.eq.s32.totalorder %s34, 15
      %p86 = por %p84, %p85
      %p88 = scmp.ne.s32.totalorder %s71, %s87
      %p89 = scmp.eq.s32.totalorder %s34, 0
      %p90 = por %p88, %p89
      %s91 = ssub.s32 %s35, %s54
      %s92 = ssub.s32 %s37, %s46
      %s93 = sor.u32 %s91, %s92
      %p94 = scmp.eq.s32.totalorder %s93, 0
      %s96 = sadd.s32 %s95, 1
      %s97 = scalar_select %p94, %s95, %s96
      %p100 = pneg %p94
      %p101 = scmp.eq.s32.totalorder %s28, 15
      %p102 = por %p100, %p101
      %p103 = scmp.ne.s32.totalorder %s95, %s98
      %p104 = scmp.eq.s32.totalorder %s28, 0
      %p105 = por %p103, %p104
      %p106 = scmp.ne.s32.totalorder %s95, %s98
      %p107 = scmp.eq.s32.totalorder %s33, 15
      %p108 = por %p106, %p107
      %p109 = scmp.ne.s32.totalorder %s98, %s99
      %p110 = scmp.eq.s32.totalorder %s33, 0
      %p111 = por %p109, %p110
      %p112 = scmp.ne.s32.totalorder %s98, %s99
      %p113 = scmp.eq.s32.totalorder %s34, 15
      %p114 = por %p112, %p113
      %p116 = scmp.ne.s32.totalorder %s99, %s115
      %p117 = scmp.eq.s32.totalorder %s34, 0
      %p118 = por %p116, %p117
      %s119 = ssub.s32 1, %s36
      %s120 = smul.u32 %s37, %s119
      %s121 = smul.u32 %s36, 3
      %s122 = sadd.s32 %s120, %s121
      %s123 = ssub.s32 1, %s50
      %s124 = smul.u32 %s46, %s123
      %s125 = smul.u32 %s50, 3
      %s126 = sadd.s32 %s124, %s125
      %s127 = ssub.s32 %s35, %s54
      %s128 = ssub.s32 %s122, %s126
      %s129 = sor.u32 %s127, %s128
      %p130 = scmp.eq.s32.totalorder %s129, 0
      %s132 = sadd.s32 %s131, 1
      %s133 = scalar_select %p130, %s131, %s132
      %p136 = pneg %p130
      %p137 = scmp.eq.s32.totalorder %s28, 15
      %p138 = por %p136, %p137
      %p139 = scmp.ne.s32.totalorder %s131, %s134
      %p140 = scmp.eq.s32.totalorder %s28, 0
      %p141 = por %p139, %p140
      %p142 = scmp.ne.s32.totalorder %s131, %s134
      %p143 = scmp.eq.s32.totalorder %s33, 15
      %p144 = por %p142, %p143
      %p145 = scmp.ne.s32.totalorder %s134, %s135
      %p146 = scmp.eq.s32.totalorder %s33, 0
      %p147 = por %p145, %p146
      %p148 = scmp.ne.s32.totalorder %s134, %s135
      %p149 = scmp.eq.s32.totalorder %s34, 15
      %p150 = por %p148, %p149
      %p152 = scmp.ne.s32.totalorder %s135, %s151
      %p153 = scmp.eq.s32.totalorder %s34, 0
      %p154 = por %p152, %p153
      %s156 = sadd.s32 %s155, 1
      %p159 = scmp.eq.s32.totalorder %s28, 15
      %p160 = scmp.ne.s32.totalorder %s155, %s157
      %p161 = scmp.eq.s32.totalorder %s28, 0
      %p162 = por %p160, %p161
      %p163 = scmp.ne.s32.totalorder %s155, %s157
      %p164 = scmp.eq.s32.totalorder %s33, 15
      %p165 = por %p163, %p164
      %p166 = scmp.ne.s32.totalorder %s157, %s158
      %p167 = scmp.eq.s32.totalorder %s33, 0
      %p168 = por %p166, %p167
      %p169 = scmp.ne.s32.totalorder %s157, %s158
      %p170 = scmp.eq.s32.totalorder %s34, 15
      %p171 = por %p169, %p170
      %p173 = scmp.ne.s32.totalorder %s158, %s172
      %p174 = scmp.eq.s32.totalorder %s34, 0
      %p175 = por %p173, %p174
      %s177 = sadd.s32 %s176, 1
      %p180 = scmp.eq.s32.totalorder %s28, 15
      %p181 = scmp.ne.s32.totalorder %s176, %s178
      %p182 = scmp.eq.s32.totalorder %s28, 0
      %p183 = por %p181, %p182
      %p184 = scmp.ne.s32.totalorder %s176, %s178
      %p185 = scmp.eq.s32.totalorder %s33, 15
      %p186 = por %p184, %p185
      %p187 = scmp.ne.s32.totalorder %s178, %s179
      %p188 = scmp.eq.s32.totalorder %s33, 0
      %p189 = por %p187, %p188
      %p190 = scmp.ne.s32.totalorder %s178, %s179
      %p191 = scmp.eq.s32.totalorder %s34, 15
      %p192 = por %p190, %p191
      %p194 = scmp.ne.s32.totalorder %s179, %s193
      %p195 = scmp.eq.s32.totalorder %s34, 0
      %p196 = por %p194, %p195
      %s198 = sadd.s32 %s197, 1
      %p201 = scmp.eq.s32.totalorder %s28, 15
      %p202 = scmp.ne.s32.totalorder %s197, %s199
      %p203 = scmp.eq.s32.totalorder %s28, 0
      %p204 = por %p202, %p203
      %p205 = scmp.ne.s32.totalorder %s197, %s199
      %p206 = scmp.eq.s32.totalorder %s33, 15
      %p207 = por %p205, %p206
      %p208 = scmp.ne.s32.totalorder %s199, %s200
      %p209 = scmp.eq.s32.totalorder %s33, 0
      %p210 = por %p208, %p209
      %p211 = scmp.ne.s32.totalorder %s199, %s200
      %p212 = scmp.eq.s32.totalorder %s34, 15
      %p213 = por %p211, %p212
      %p215 = scmp.ne.s32.totalorder %s200, %s214
      %p216 = scmp.eq.s32.totalorder %s34, 0
      %p217 = por %p215, %p216
      %s219 = sadd.s32 %s218, 1
      %p222 = scmp.eq.s32.totalorder %s28, 15
      %p223 = scmp.ne.s32.totalorder %s218, %s220
      %p224 = scmp.eq.s32.totalorder %s28, 0
      %p225 = por %p223, %p224
      %p226 = scmp.ne.s32.totalorder %s218, %s220
      %p227 = scmp.eq.s32.totalorder %s33, 15
      %p228 = por %p226, %p227
      %p229 = scmp.ne.s32.totalorder %s220, %s221
      %p230 = scmp.eq.s32.totalorder %s33, 0
      %p231 = por %p229, %p230
      %p232 = scmp.ne.s32.totalorder %s220, %s221
      %p233 = scmp.eq.s32.totalorder %s34, 15
      %p234 = por %p232, %p233
      %p236 = scmp.ne.s32.totalorder %s221, %s235
      %p237 = scmp.eq.s32.totalorder %s34, 0
      %p238 = por %p236, %p237
      %s240 = sadd.s32 %s239, 1
      %p243 = scmp.eq.s32.totalorder %s28, 15
      %p244 = scmp.ne.s32.totalorder %s239, %s241
      %p245 = scmp.eq.s32.totalorder %s28, 0
      %p246 = por %p244, %p245
      %p247 = scmp.ne.s32.totalorder %s239, %s241
      %p248 = scmp.eq.s32.totalorder %s33, 15
      %p249 = por %p247, %p248
      %p250 = scmp.ne.s32.totalorder %s241, %s242
      %p251 = scmp.eq.s32.totalorder %s33, 0
      %p252 = por %p250, %p251
      %p253 = scmp.ne.s32.totalorder %s241, %s242
      %p254 = scmp.eq.s32.totalorder %s34, 15
      %p255 = por %p253, %p254
      %p257 = scmp.ne.s32.totalorder %s242, %s256
      %p258 = scmp.eq.s32.totalorder %s34, 0
      %p259 = por %p257, %p258
      %s261 = sadd.s32 %s260, 1
      %p264 = scmp.eq.s32.totalorder %s28, 15
      %p265 = scmp.ne.s32.totalorder %s260, %s262
      %p266 = scmp.eq.s32.totalorder %s28, 0
      %p267 = por %p265, %p266
      %p268 = scmp.ne.s32.totalorder %s260, %s262
      %p269 = scmp.eq.s32.totalorder %s33, 15
      %p270 = por %p268, %p269
      %p271 = scmp.ne.s32.totalorder %s262, %s263
      %p272 = scmp.eq.s32.totalorder %s33, 0
      %p273 = por %p271, %p272
      %p274 = scmp.ne.s32.totalorder %s262, %s263
      %p275 = scmp.eq.s32.totalorder %s34, 15
      %p276 = por %p274, %p275
      %p278 = scmp.ne.s32.totalorder %s263, %s277
      %p279 = scmp.eq.s32.totalorder %s34, 0
      %p280 = por %p278, %p279
      %s282 = sadd.s32 %s281, 1
      %p285 = scmp.eq.s32.totalorder %s28, 15
      %p286 = scmp.ne.s32.totalorder %s281, %s283
      %p287 = scmp.eq.s32.totalorder %s28, 0
      %p288 = por %p286, %p287
      %p289 = scmp.ne.s32.totalorder %s281, %s283
      %p290 = scmp.eq.s32.totalorder %s33, 15
      %p291 = por %p289, %p290
      %p292 = scmp.ne.s32.totalorder %s283, %s284
      %p293 = scmp.eq.s32.totalorder %s33, 0
      %p294 = por %p292, %p293
      %p295 = scmp.ne.s32.totalorder %s283, %s284
      %p296 = scmp.eq.s32.totalorder %s34, 15
      %p297 = por %p295, %p296
      %p299 = scmp.ne.s32.totalorder %s284, %s298
      %p300 = scmp.eq.s32.totalorder %s34, 0
      %p301 = por %p299, %p300
      %s303 = sadd.s32 %s302, 1
      %p306 = scmp.eq.s32.totalorder %s28, 15
      %p307 = scmp.ne.s32.totalorder %s302, %s304
      %p308 = scmp.eq.s32.totalorder %s28, 0
      %p309 = por %p307, %p308
      %p310 = scmp.ne.s32.totalorder %s302, %s304
      %p311 = scmp.eq.s32.totalorder %s33, 15
      %p312 = por %p310, %p311
      %p313 = scmp.ne.s32.totalorder %s304, %s305
      %p314 = scmp.eq.s32.totalorder %s33, 0
      %p315 = por %p313, %p314
      %p316 = scmp.ne.s32.totalorder %s304, %s305
      %p317 = scmp.eq.s32.totalorder %s34, 15
      %p318 = por %p316, %p317
      %p320 = scmp.ne.s32.totalorder %s305, %s319
      %p321 = scmp.eq.s32.totalorder %s34, 0
      %p322 = por %p320, %p321
      %s323 = smul.u32 %s37, %s36
      %s324 = smul.u32 %s46, %s50
      %s325 = ssub.s32 %s35, %s54
      %s326 = ssub.s32 %s323, %s324
      %s327 = sor.u32 %s325, %s326
      %p328 = scmp.eq.s32.totalorder %s327, 0
      %s330 = sadd.s32 %s329, 1
      %s331 = scalar_select %p328, %s329, %s330
      %p334 = pneg %p328
      %p335 = scmp.eq.s32.totalorder %s28, 15
      %p336 = por %p334, %p335
      %p337 = scmp.ne.s32.totalorder %s329, %s332
      %p338 = scmp.eq.s32.totalorder %s28, 0
      %p339 = por %p337, %p338
      %p340 = scmp.ne.s32.totalorder %s329, %s332
      %p341 = scmp.eq.s32.totalorder %s33, 15
      %p342 = por %p340, %p341
      %p343 = scmp.ne.s32.totalorder %s332, %s333
      %p344 = scmp.eq.s32.totalorder %s33, 0
      %p345 = por %p343, %p344
      %p346 = scmp.ne.s32.totalorder %s332, %s333
      %p347 = scmp.eq.s32.totalorder %s34, 15
      %p348 = por %p346, %p347
      %p350 = scmp.ne.s32.totalorder %s333, %s349
      %p351 = scmp.eq.s32.totalorder %s34, 0
      %p352 = por %p350, %p351
      %p353 = scmp.le.s32.totalorder 1, %s28
      %p354 = scmp.lt.s32.totalorder %s28, 17
      %p355 = pnand %p353, %p354
      %p356 = pneg %p355
      // Predicated region
      $region9: #{tpu_custom_call.1} parent=5 // pred_check
        _
      $region10: #{tpu_custom_call.1} parent=5 // pred_check_branch
        %358 = sbr.rel (%p355) target = $region12
      $region11: #{tpu_custom_call.1} parent=5 // pred_region
        %s359 = ssub.s32 %s28, 1
        // Predicated region
        $region13: #{tpu_custom_call.1} parent=11 // pred_check
          %p360 = pneg %p168
        $region14: #{tpu_custom_call.1} parent=11 // pred_check_branch
          %362 = sbr.rel (%p360) target = $region16
        $region15: #{tpu_custom_call.1} parent=11 // pred_region
          %s364 = ssub.s32 1024, 1024
          %365 = vsyncadd [#allocation12], %s364
          %s366 = sshll.u32 [#allocation11], 4
          %s367 = int_to_ptr.vmem [resolvable:$true] %s366
          %372 = dma.hbm_to_vmem [thread:$0]  %s3, 1024, %s367, [#allocation12], 64, 64, 4
        $region16: #{tpu_custom_call.1} parent=11 // pred_fallthru
          _
        // Predicated region
        $region17: #{tpu_custom_call.1} parent=11 // pred_check
          %p373 = pneg %p189
        $region18: #{tpu_custom_call.1} parent=11 // pred_check_branch
          %375 = sbr.rel (%p373) target = $region20
        $region19: #{tpu_custom_call.1} parent=11 // pred_region
          _
        $region20: #{tpu_custom_call.1} parent=11 // pred_fallthru
          _
        // Predicated region
        $region21: #{tpu_custom_call.1} parent=11 // pred_check
          %p376 = pneg %p210
        $region22: #{tpu_custom_call.1} parent=11 // pred_check_branch
          %378 = sbr.rel (%p376) target = $region24
        $region23: #{tpu_custom_call.1} parent=11 // pred_region
          %s380 = ssub.s32 1024, 1024
          %381 = vsyncadd [#allocation12], %s380
          %s382 = sshll.u32 [#allocation13], 4
          %s383 = int_to_ptr.vmem [resolvable:$true] %s382
          %388 = dma.hbm_to_vmem [thread:$0]  %s5, 1024, %s383, [#allocation12], 64, 64, 4
        $region24: #{tpu_custom_call.1} parent=11 // pred_fallthru
          _
        // Predicated region
        $region25: #{tpu_custom_call.1} parent=11 // pred_check
          %p389 = pneg %p231
        $region26: #{tpu_custom_call.1} parent=11 // pred_check_branch
          %391 = sbr.rel (%p389) target = $region28
        $region27: #{tpu_custom_call.1} parent=11 // pred_region
          _
        $region28: #{tpu_custom_call.1} parent=11 // pred_fallthru
          _
        // Predicated region
        $region29: #{tpu_custom_call.1} parent=11 // pred_check
          %p392 = pneg %p252
        $region30: #{tpu_custom_call.1} parent=11 // pred_check_branch
          %394 = sbr.rel (%p392) target = $region32
        $region31: #{tpu_custom_call.1} parent=11 // pred_region
          %s396 = ssub.s32 2048, 2048
          %397 = vsyncadd [#allocation15], %s396
          %s398 = sshll.u32 [#allocation14], 4
          %s399 = int_to_ptr.vmem [resolvable:$true] %s398
          %404 = dma.hbm_to_vmem [thread:$0]  %s7, 2048, %s399, [#allocation15], 128, 128, 8
        $region32: #{tpu_custom_call.1} parent=11 // pred_fallthru
          _
        // Predicated region
        $region33: #{tpu_custom_call.1} parent=11 // pred_check
          %p405 = pneg %p273
        $region34: #{tpu_custom_call.1} parent=11 // pred_check_branch
          %407 = sbr.rel (%p405) target = $region36
        $region35: #{tpu_custom_call.1} parent=11 // pred_region
          _
        $region36: #{tpu_custom_call.1} parent=11 // pred_fallthru
          _
        // Predicated region
        $region37: #{tpu_custom_call.1} parent=11 // pred_check
          %p408 = pneg %p294
        $region38: #{tpu_custom_call.1} parent=11 // pred_check_branch
          %410 = sbr.rel (%p408) target = $region40
        $region39: #{tpu_custom_call.1} parent=11 // pred_region
          %s412 = ssub.s32 2048, 2048
          %413 = vsyncadd [#allocation15], %s412
          %s414 = sshll.u32 [#allocation16], 4
          %s415 = int_to_ptr.vmem [resolvable:$true] %s414
          %420 = dma.hbm_to_vmem [thread:$0]  %s9, 2048, %s415, [#allocation15], 128, 128, 8
        $region40: #{tpu_custom_call.1} parent=11 // pred_fallthru
          _
        // Predicated region
        $region41: #{tpu_custom_call.1} parent=11 // pred_check
          %p421 = pneg %p315
        $region42: #{tpu_custom_call.1} parent=11 // pred_check_branch
          %423 = sbr.rel (%p421) target = $region44
        $region43: #{tpu_custom_call.1} parent=11 // pred_region
          _
        $region44: #{tpu_custom_call.1} parent=11 // pred_fallthru
          _
      $region12: #{tpu_custom_call.1} parent=5 // pred_fallthru
        _
      %p424 = scmp.lt.s32.totalorder %s28, 16
      // Predicated region
      $region45: #{tpu_custom_call.1} parent=5 // pred_check
        %p425 = pneg %p424
      $region46: #{tpu_custom_call.1} parent=5 // pred_check_branch
        %427 = sbr.rel (%p425) target = $region48
      $region47: #{tpu_custom_call.1} parent=5 // pred_region
        // Predicated region
        $region49: #{tpu_custom_call.1} parent=47 // pred_check
          %p428 = pneg %p77
        $region50: #{tpu_custom_call.1} parent=47 // pred_check_branch
          %430 = sbr.rel (%p428) target = $region52
        $region51: #{tpu_custom_call.1} parent=47 // pred_region
          %s431 = sand.u32 %s67, 1
          %s432 = scalar_lea.sflag [#allocation6], %s431
          %s433 = sand.u32 %s67, 1
          %s434 = smul.addr %s433, 32
          %s435 = scalar_lea.vmem [#allocation5], %s434
          %s436 = ssub.s32 1, %s36
          %s437 = smul.u32 %s37, %s436
          %s438 = smul.u32 %s36, 3
          %s439 = sadd.s32 %s437, %s438
          %s440 = smul.u32 8, %s439
          %s442 = ssub.s32 512, 512
          %443 = vsyncadd %s432, %s442
          %s444 = smul.addr %s35, 32
          %s445 = sadd.s32 %s440, %s444
          %s446 = smul.addr %s445, 64
          %s447 = scalar_lea.hbm %s0, %s446
          %s448 = sshll.u32 %s435, 4
          %s449 = int_to_ptr.vmem [resolvable:$true] %s448
          %454 = dma.hbm_to_vmem [thread:$0]  %s447, 512, %s449, %s432, 64, 64, 4
        $region52: #{tpu_custom_call.1} parent=47 // pred_fallthru
          _
        // Predicated region
        $region53: #{tpu_custom_call.1} parent=47 // pred_check
          %p455 = pneg %p105
        $region54: #{tpu_custom_call.1} parent=47 // pred_check_branch
          %457 = sbr.rel (%p455) target = $region56
        $region55: #{tpu_custom_call.1} parent=47 // pred_region
          %s458 = sand.u32 %s28, 1
          %s459 = scalar_lea.sflag [#allocation9], %s458
          %s460 = sand.u32 %s95, 1
          %s461 = smul.addr %s460, 32
          %s462 = scalar_lea.vmem [#allocation8], %s461
          %s463 = smul.u32 8, %s37
          %s465 = ssub.s32 512, 512
          %466 = vsyncadd %s459, %s465
          %s467 = smul.addr %s35, 32
          %s468 = sadd.s32 %s463, %s467
          %s469 = smul.addr %s468, 64
          %s470 = scalar_lea.hbm %s1, %s469
          %s471 = sshll.u32 %s462, 4
          %s472 = int_to_ptr.vmem [resolvable:$true] %s471
          %477 = dma.hbm_to_vmem [thread:$0]  %s470, 512, %s472, %s459, 64, 64, 4
        $region56: #{tpu_custom_call.1} parent=47 // pred_fallthru
          _
        // Predicated region
        $region57: #{tpu_custom_call.1} parent=47 // pred_check
          %p478 = pneg %p141
        $region58: #{tpu_custom_call.1} parent=47 // pred_check_branch
          %480 = sbr.rel (%p478) target = $region60
        $region59: #{tpu_custom_call.1} parent=47 // pred_region
          %s481 = sand.u32 %s28, 1
          %s482 = scalar_lea.sflag [#allocation9], %s481
          %s483 = sand.u32 %s131, 1
          %s484 = smul.addr %s483, 32
          %s485 = scalar_lea.vmem [#allocation10], %s484
          %s486 = ssub.s32 1, %s36
          %s487 = smul.u32 %s37, %s486
          %s488 = smul.u32 %s36, 3
          %s489 = sadd.s32 %s487, %s488
          %s490 = smul.u32 8, %s489
          %s492 = ssub.s32 512, 512
          %493 = vsyncadd %s482, %s492
          %s494 = smul.addr %s35, 32
          %s495 = sadd.s32 %s490, %s494
          %s496 = smul.addr %s495, 64
          %s497 = scalar_lea.hbm %s2, %s496
          %s498 = sshll.u32 %s485, 4
          %s499 = int_to_ptr.vmem [resolvable:$true] %s498
          %504 = dma.hbm_to_vmem [thread:$0]  %s497, 512, %s499, %s482, 64, 64, 4
        $region60: #{tpu_custom_call.1} parent=47 // pred_fallthru
          _
      $region48: #{tpu_custom_call.1} parent=5 // pred_fallthru
        _
      %p505 = scmp.le.s32.totalorder 1, %s28
      %p506 = scmp.lt.s32.totalorder %s28, 17
      %p507 = pnand %p505, %p506
      %p508 = pneg %p507
      // Predicated region
      $region61: #{tpu_custom_call.1} parent=5 // pred_check
        _
      $region62: #{tpu_custom_call.1} parent=5 // pred_check_branch
        %510 = sbr.rel (%p507) target = $region64
      $region63: #{tpu_custom_call.1} parent=5 // pred_region
        %s511 = ssub.s32 %s28, 1
        %s512 = sand.u32 %s70, 1
        %s513 = scalar_lea.sflag [#allocation6], %s512
        %s514 = sand.u32 %s70, 1
        %s515 = smul.addr %s514, 32
        %s516 = scalar_lea.vmem [#allocation5], %s515
        // Predicated region
        $region65: #{tpu_custom_call.1} parent=63 // pred_check
          %p517 = pneg %p83
        $region66: #{tpu_custom_call.1} parent=63 // pred_check_branch
          %519 = sbr.rel (%p517) target = $region68
        $region67: #{tpu_custom_call.1} parent=63 // pred_region
          %520 = dma.done %s513, 512
        $region68: #{tpu_custom_call.1} parent=63 // pred_fallthru
          _
        %s521 = sand.u32 %s33, 1
        %s522 = scalar_lea.sflag [#allocation9], %s521
        %s523 = sand.u32 %s98, 1
        %s524 = smul.addr %s523, 32
        %s525 = scalar_lea.vmem [#allocation8], %s524
        // Predicated region
        $region69: #{tpu_custom_call.1} parent=63 // pred_check
          %p526 = pneg %p111
        $region70: #{tpu_custom_call.1} parent=63 // pred_check_branch
          %528 = sbr.rel (%p526) target = $region72
        $region71: #{tpu_custom_call.1} parent=63 // pred_region
          %529 = dma.done %s522, 512
        $region72: #{tpu_custom_call.1} parent=63 // pred_fallthru
          _
        %s530 = sand.u32 %s33, 1
        %s531 = scalar_lea.sflag [#allocation9], %s530
        %s532 = sand.u32 %s134, 1
        %s533 = smul.addr %s532, 32
        %s534 = scalar_lea.vmem [#allocation10], %s533
        // Predicated region
        $region73: #{tpu_custom_call.1} parent=63 // pred_check
          %p535 = pneg %p147
        $region74: #{tpu_custom_call.1} parent=63 // pred_check_branch
          %537 = sbr.rel (%p535) target = $region76
        $region75: #{tpu_custom_call.1} parent=63 // pred_region
          %538 = dma.done %s531, 512
        $region76: #{tpu_custom_call.1} parent=63 // pred_fallthru
          _
        // Predicated region
        $region77: #{tpu_custom_call.1} parent=63 // pred_check
          %p539 = pneg %p168
        $region78: #{tpu_custom_call.1} parent=63 // pred_check_branch
          %541 = sbr.rel (%p539) target = $region80
        $region79: #{tpu_custom_call.1} parent=63 // pred_region
          %542 = dma.done [#allocation12], 1024
        $region80: #{tpu_custom_call.1} parent=63 // pred_fallthru
          _
        // Predicated region
        $region81: #{tpu_custom_call.1} parent=63 // pred_check
          %p543 = pneg %p210
        $region82: #{tpu_custom_call.1} parent=63 // pred_check_branch
          %545 = sbr.rel (%p543) target = $region84
        $region83: #{tpu_custom_call.1} parent=63 // pred_region
          %546 = dma.done [#allocation12], 1024
        $region84: #{tpu_custom_call.1} parent=63 // pred_fallthru
          _
        // Predicated region
        $region85: #{tpu_custom_call.1} parent=63 // pred_check
          %p547 = pneg %p252
        $region86: #{tpu_custom_call.1} parent=63 // pred_check_branch
          %549 = sbr.rel (%p547) target = $region88
        $region87: #{tpu_custom_call.1} parent=63 // pred_region
          %550 = dma.done [#allocation15], 2048
        $region88: #{tpu_custom_call.1} parent=63 // pred_fallthru
          _
        // Predicated region
        $region89: #{tpu_custom_call.1} parent=63 // pred_check
          %p551 = pneg %p294
        $region90: #{tpu_custom_call.1} parent=63 // pred_check_branch
          %553 = sbr.rel (%p551) target = $region92
        $region91: #{tpu_custom_call.1} parent=63 // pred_region
          %554 = dma.done [#allocation15], 2048
        $region92: #{tpu_custom_call.1} parent=63 // pred_fallthru
          _
        %s555 = sand.u32 %s70, 1
        %s556 = scalar_lea.sflag [#allocation6], %s555
        %s557 = sand.u32 %s70, 1
        %s558 = smul.addr %s557, 32
        %s559 = scalar_lea.vmem [#allocation5], %s558
        %p560 = pneg %p83
        %p561 = pneg %p80
        %s562 = sand.u32 %s33, 1
        %s563 = scalar_lea.sflag [#allocation9], %s562
        %s564 = sand.u32 %s98, 1
        %s565 = smul.addr %s564, 32
        %s566 = scalar_lea.vmem [#allocation8], %s565
        %p567 = pneg %p111
        %p568 = pneg %p108
        %s569 = sand.u32 %s33, 1
        %s570 = scalar_lea.sflag [#allocation9], %s569
        %s571 = sand.u32 %s134, 1
        %s572 = smul.addr %s571, 32
        %s573 = scalar_lea.vmem [#allocation10], %s572
        %p574 = pneg %p147
        %p575 = pneg %p144
        %p576 = pneg %p168
        %p577 = pneg %p165
        %p578 = pneg %p189
        %p579 = pneg %p186
        %p580 = pneg %p210
        %p581 = pneg %p207
        %p582 = pneg %p231
        %p583 = pneg %p228
        %p584 = pneg %p252
        %p585 = pneg %p249
        %p586 = pneg %p273
        %p587 = pneg %p270
        %p588 = pneg %p294
        %p589 = pneg %p291
        %p590 = pneg %p315
        %p591 = pneg %p312
        %p592 = pneg %p345
        %p593 = pneg %p342
        %s594 = sand.u32 %s332, 1
        %s595 = scalar_lea.sflag [#allocation7], %s594
        %s596 = sand.u32 %s332, 1
        %s597 = smul.addr %s596, 32
        %s598 = scalar_lea.vmem [#allocation17], %s597
        %s599 = ssub.s32 1, %s39
        %s600 = smul.u32 %s40, %s599
        %s601 = smul.u32 %s39, 3
        %s602 = sadd.s32 %s600, %s601
        %s603 = smul.u32 8, %s602
        %s604 = smul.u32 8, %s40
        %s605 = ssub.s32 1, %s39
        %s606 = smul.u32 %s40, %s605
        %s607 = smul.u32 %s39, 3
        %s608 = sadd.s32 %s606, %s607
        %s609 = smul.u32 8, %s608
        %s610 = smul.u32 %s40, %s39
        %s611 = smul.u32 8, %s610
        %p613 = scmp.eq.s32.totalorder %s39, 0
        // Predicated region
        $region93: #{tpu_custom_call.1} parent=63 // pred_check
          %p614 = pneg %p613
        $region94: #{tpu_custom_call.1} parent=63 // pred_check_branch
          %616 = sbr.rel (%p614) target = $region96
        $region95: #{tpu_custom_call.1} parent=63 // pred_region
          %p617 = scmp.eq.s32.totalorder %s40, 0
          // Predicated region
          $region97: #{tpu_custom_call.1} parent=95 // pred_check
            %p618 = pneg %p617
          $region98: #{tpu_custom_call.1} parent=95 // pred_check_branch
            %620 = sbr.rel (%p618) target = $region100
          $region99: #{tpu_custom_call.1} parent=95 // pred_region
            %621 = vst [vmem:[#allocation3] sm:$0x1] 0.0
          $region100: #{tpu_custom_call.1} parent=95 // pred_fallthru
            _
          %v622 = vld [vmem:[%s516] sm:$0xf]
          %v623 = vld [vmem:[%s516 + $0x4] sm:$0xf]
          %v624 = vld [vmem:[%s516 + $0x8] sm:$0xf]
          %v625 = vld [vmem:[%s516 + $0xc] sm:$0xf]
          %v626 = vld [vmem:[%s516 + $0x10] sm:$0xf]
          %v627 = vld [vmem:[%s516 + $0x14] sm:$0xf]
          %v628 = vld [vmem:[%s516 + $0x18] sm:$0xf]
          %v629 = vld [vmem:[%s516 + $0x1c] sm:$0xf]
          %v630 = vunpack.c.l.bf16 %v622
          %v631 = vunpack.c.l.bf16 %v623
          %v632 = vunpack.c.l.bf16 %v624
          %v633 = vunpack.c.l.bf16 %v625
          %v634 = vunpack.c.l.bf16 %v626
          %v635 = vunpack.c.l.bf16 %v627
          %v636 = vunpack.c.l.bf16 %v628
          %v637 = vunpack.c.l.bf16 %v629
          %v638 = vld [vmem:[%s525] sm:$0xf]
          %v639 = vld [vmem:[%s525 + $0x4] sm:$0xf]
          %v640 = vld [vmem:[%s525 + $0x8] sm:$0xf]
          %v641 = vld [vmem:[%s525 + $0xc] sm:$0xf]
          %v642 = vld [vmem:[%s525 + $0x10] sm:$0xf]
          %v643 = vld [vmem:[%s525 + $0x14] sm:$0xf]
          %v644 = vld [vmem:[%s525 + $0x18] sm:$0xf]
          %v645 = vld [vmem:[%s525 + $0x1c] sm:$0xf]
          %v646 = vunpack.c.l.bf16 %v638
          %v647 = vunpack.c.l.bf16 %v639
          %v648 = vunpack.c.l.bf16 %v640
          %v649 = vunpack.c.l.bf16 %v641
          %v650 = vunpack.c.l.bf16 %v642
          %v651 = vunpack.c.l.bf16 %v643
          %v652 = vunpack.c.l.bf16 %v644
          %v653 = vunpack.c.l.bf16 %v645
          %v654 = vadd.f32 %v630, %v646
          %v655 = vadd.f32 %v631, %v647
          %v656 = vadd.f32 %v632, %v648
          %v657 = vadd.f32 %v633, %v649
          %v658 = vadd.f32 %v634, %v650
          %v659 = vadd.f32 %v635, %v651
          %v660 = vadd.f32 %v636, %v652
          %v661 = vadd.f32 %v637, %v653
          %v662 = vld [vmem:[%s534] sm:$0xf]
          %v663 = vld [vmem:[%s534 + $0x4] sm:$0xf]
          %v664 = vld [vmem:[%s534 + $0x8] sm:$0xf]
          %v665 = vld [vmem:[%s534 + $0xc] sm:$0xf]
          %v666 = vld [vmem:[%s534 + $0x10] sm:$0xf]
          %v667 = vld [vmem:[%s534 + $0x14] sm:$0xf]
          %v668 = vld [vmem:[%s534 + $0x18] sm:$0xf]
          %v669 = vld [vmem:[%s534 + $0x1c] sm:$0xf]
          %v670 = vunpack.c.l.bf16 %v662
          %v671 = vunpack.c.l.bf16 %v663
          %v672 = vunpack.c.l.bf16 %v664
          %v673 = vunpack.c.l.bf16 %v665
          %v674 = vunpack.c.l.bf16 %v666
          %v675 = vunpack.c.l.bf16 %v667
          %v676 = vunpack.c.l.bf16 %v668
          %v677 = vunpack.c.l.bf16 %v669
          %v678 = vadd.f32 %v654, %v670
          %v679 = vadd.f32 %v655, %v671
          %v680 = vadd.f32 %v656, %v672
          %v681 = vadd.f32 %v657, %v673
          %v682 = vadd.f32 %v658, %v674
          %v683 = vadd.f32 %v659, %v675
          %v684 = vadd.f32 %v660, %v676
          %v685 = vadd.f32 %v661, %v677
          %v686 = vpack.c.bf16 %v679, %v678
          %v687 = vpack.c.bf16 %v681, %v680
          %v688 = vpack.c.bf16 %v683, %v682
          %v689 = vpack.c.bf16 %v685, %v684
          %v694 = vunpack.c.l.b16 %v686
          %v695 = vunpack.c.h.b16 %v686
          %v696 = vunpack.c.l.b16 %v687
          %v697 = vunpack.c.h.b16 %v687
          %v698 = vunpack.c.l.b16 %v688
          %v699 = vunpack.c.h.b16 %v688
          %v700 = vunpack.c.l.b16 %v689
          %v701 = vunpack.c.h.b16 %v689
          %v702 = vpack.c.b16 %v694, %v694
          %v703 = vpack.c.b16 %v695, %v695
          %v704 = vpack.c.b16 %v696, %v696
          %v705 = vpack.c.b16 %v697, %v697
          %v706 = vpack.c.b16 %v698, %v698
          %v707 = vpack.c.b16 %v699, %v699
          %v708 = vpack.c.b16 %v700, %v700
          %v709 = vpack.c.b16 %v701, %v701
          %s718 = smul.u32 %s40, 8
          %s719 = smul.addr %s718, 4
          %s720 = scalar_lea.vmem [#allocation2], %s719
          %721 = vst [vmem:[%s720] sm:$0xf] %v702
          %722 = vst [vmem:[%s720 + $0x4] sm:$0xf] %v703
          %723 = vst [vmem:[%s720 + $0x8] sm:$0xf] %v704
          %724 = vst [vmem:[%s720 + $0xc] sm:$0xf] %v705
          %725 = vst [vmem:[%s720 + $0x10] sm:$0xf] %v706
          %726 = vst [vmem:[%s720 + $0x14] sm:$0xf] %v707
          %727 = vst [vmem:[%s720 + $0x18] sm:$0xf] %v708
          %728 = vst [vmem:[%s720 + $0x1c] sm:$0xf] %v709
          %v729 = vld [vmem:[#allocation3] sm:$0x1]
          %v730 = vadd.f32 %v678, %v679
          %v731 = vadd.f32 %v730, %v680
          %v732 = vadd.f32 %v731, %v681
          %v733 = vadd.f32 %v732, %v682
          %v734 = vadd.f32 %v733, %v683
          %v735 = vadd.f32 %v734, %v684
          %v736 = vadd.f32 %v735, %v685
          %v737 = vrot.slane %v736, 4
          %v738 = vadd.f32 %v736, %v737
          %v739 = vrot.slane %v738, 2
          %v740 = vadd.f32 %v738, %v739
          %v741 = vrot.slane %v740, 1
          %v742 = vadd.f32 %v740, %v741
          %v743 = vadd.f32 %v729, %v742
          %744 = vst [vmem:[#allocation3] sm:$0x1] %v743
          %p745 = scmp.eq.s32.totalorder %s40, 3
          // Predicated region
          $region101: #{tpu_custom_call.1} parent=95 // pred_check
            %p746 = pneg %p745
          $region102: #{tpu_custom_call.1} parent=95 // pred_check_branch
            %748 = sbr.rel (%p746) target = $region104
          $region103: #{tpu_custom_call.1} parent=95 // pred_region
            %v749 = vld [vmem:[#allocation3] sm:$0x1]
            %v750 = vmul.f32 %v749, 0.00390625
            %v752 = vlaneseq
            %v753 = vshrl.u32 %v752, 7
            %v754 = vsub.s32 0, %v753
            %v755 = vrot.slane %v750, %v754
            %v757 = vld [vmem:[#allocation14] sm:$0xff]
            %v758 = vld [vmem:[#allocation14 + $0x8] sm:$0xff]
            %v759 = vld [vmem:[#allocation14 + $0x10] sm:$0xff]
            %v760 = vld [vmem:[#allocation14 + $0x18] sm:$0xff]
            %v761 = vld [vmem:[#allocation14 + $0x20] sm:$0xff]
            %v762 = vld [vmem:[#allocation14 + $0x28] sm:$0xff]
            %v763 = vld [vmem:[#allocation14 + $0x30] sm:$0xff]
            %v764 = vld [vmem:[#allocation14 + $0x38] sm:$0xff]
            %v765 = vld [vmem:[#allocation14 + $0x40] sm:$0xff]
            %v766 = vld [vmem:[#allocation14 + $0x48] sm:$0xff]
            %v767 = vld [vmem:[#allocation14 + $0x50] sm:$0xff]
            %v768 = vld [vmem:[#allocation14 + $0x58] sm:$0xff]
            %v769 = vld [vmem:[#allocation14 + $0x60] sm:$0xff]
            %v770 = vld [vmem:[#allocation14 + $0x68] sm:$0xff]
            %v771 = vld [vmem:[#allocation14 + $0x70] sm:$0xff]
            %v772 = vld [vmem:[#allocation14 + $0x78] sm:$0xff]
            %v773 = vld [vmem:[%s8] sm:$0x1]
            %v775 = vlaneseq
            %v776 = vshrl.u32 %v775, 7
            %v777 = vsub.s32 0, %v776
            %v778 = vrot.slane %v773, %v777
            %780 = vmatprep.subr.mxu0 0.0
            %781 = vmatpush1.msra.mxu0 %v772
            %782 = vmatprep.subr.mxu0 0.0
            %783 = vmatpush1.msra.mxu0 %v771
            %784 = vmatprep.subr.mxu0 0.0
            %785 = vmatpush1.msra.mxu0 %v770
            %786 = vmatprep.subr.mxu0 0.0
            %787 = vmatpush1.msra.mxu0 %v769
            %788 = vmatprep.subr.mxu0 0.0
            %789 = vmatpush1.msra.mxu0 %v768
            %790 = vmatprep.subr.mxu0 0.0
            %791 = vmatpush1.msra.mxu0 %v767
            %792 = vmatprep.subr.mxu0 0.0
            %793 = vmatpush1.msra.mxu0 %v766
            %794 = vmatprep.subr.mxu0 0.0
            %795 = vmatpush1.msra.mxu0 %v765
            %796 = vmatprep.subr.mxu0 0.0
            %797 = vmatpush1.msra.mxu0 %v764
            %798 = vmatprep.subr.mxu0 0.0
            %799 = vmatpush1.msra.mxu0 %v763
            %800 = vmatprep.subr.mxu0 0.0
            %801 = vmatpush1.msra.mxu0 %v762
            %802 = vmatprep.subr.mxu0 0.0
            %803 = vmatpush1.msra.mxu0 %v761
            %804 = vmatprep.subr.mxu0 0.0
            %805 = vmatpush1.msra.mxu0 %v760
            %806 = vmatprep.subr.mxu0 0.0
            %807 = vmatpush1.msra.mxu0 %v759
            %808 = vmatprep.subr.mxu0 0.0
            %809 = vmatpush1.msra.mxu0 %v758
            %810 = vmatprep.subr.mxu0 0.0
            %811 = vmatpush1.msra.mxu0 %v757
            %812 = vmatprep.subr.mxu0 0.0
            %813 = vmatpush2.msra.mxu0 0.0
            %814 = vmatprep.subr.mxu0 0.0
            %815 = vmatpush2.msra.mxu0 0.0
            %816 = vmatprep.subr.mxu0 0.0
            %817 = vmatpush2.msra.mxu0 0.0
            %818 = vmatprep.subr.mxu0 0.0
            %819 = vmatpush2.msra.mxu0 0.0
            %820 = vmatprep.subr.mxu0 0.0
            %821 = vmatpush2.msra.mxu0 0.0
            %822 = vmatprep.subr.mxu0 0.0
            %823 = vmatpush2.msra.mxu0 0.0
            %824 = vmatprep.subr.mxu0 0.0
            %825 = vmatpush2.msra.mxu0 0.0
            %826 = vmatprep.subr.mxu0 0.0
            %827 = vmatpush2.msra.mxu0 0.0
            %828 = vmatprep.subr.mxu0 0.0
            %829 = vmatpush2.msra.mxu0 0.0
            %830 = vmatprep.subr.mxu0 0.0
            %831 = vmatpush2.msra.mxu0 0.0
            %832 = vmatprep.subr.mxu0 0.0
            %833 = vmatpush2.msra.mxu0 0.0
            %834 = vmatprep.subr.mxu0 0.0
            %835 = vmatpush2.msra.mxu0 0.0
            %836 = vmatprep.subr.mxu0 0.0
            %837 = vmatpush2.msra.mxu0 0.0
            %838 = vmatprep.subr.mxu0 0.0
            %839 = vmatpush2.msra.mxu0 0.0
            %840 = vmatprep.subr.mxu0 0.0
            %841 = vmatpush2.msra.mxu0 0.0
            %842 = vmatprep.subr.mxu0 0.0
            %843 = vmatpush2.msra.mxu0 0.0
            %844 = vmatprep.mubr.f32.mxu0 0.0
            %845 = vmatmul.mubr.f32.gmra.mxu0 %v755
            %v846 = vpop.f32.mrf.mxu0
            %v847 = vadd.f32 %v778, %v846
            %v848 = vpop.f32.mrf.mxu0
            %849 = vdwg.mxu0
            %v850 = vmax.f32 %v847, 0.0
            %v851 = vld [vmem:[#allocation16] sm:$0xff]
            %v852 = vld [vmem:[#allocation16 + $0x8] sm:$0xff]
            %v853 = vld [vmem:[#allocation16 + $0x10] sm:$0xff]
            %v854 = vld [vmem:[#allocation16 + $0x18] sm:$0xff]
            %v855 = vld [vmem:[#allocation16 + $0x20] sm:$0xff]
            %v856 = vld [vmem:[#allocation16 + $0x28] sm:$0xff]
            %v857 = vld [vmem:[#allocation16 + $0x30] sm:$0xff]
            %v858 = vld [vmem:[#allocation16 + $0x38] sm:$0xff]
            %v859 = vld [vmem:[#allocation16 + $0x40] sm:$0xff]
            %v860 = vld [vmem:[#allocation16 + $0x48] sm:$0xff]
            %v861 = vld [vmem:[#allocation16 + $0x50] sm:$0xff]
            %v862 = vld [vmem:[#allocation16 + $0x58] sm:$0xff]
            %v863 = vld [vmem:[#allocation16 + $0x60] sm:$0xff]
            %v864 = vld [vmem:[#allocation16 + $0x68] sm:$0xff]
            %v865 = vld [vmem:[#allocation16 + $0x70] sm:$0xff]
            %v866 = vld [vmem:[#allocation16 + $0x78] sm:$0xff]
            %v867 = vld [vmem:[%s10] sm:$0x1]
            %v869 = vlaneseq
            %v870 = vshrl.u32 %v869, 7
            %v871 = vsub.s32 0, %v870
            %v872 = vrot.slane %v867, %v871
            %874 = vmatprep.subr.mxu0 0.0
            %875 = vmatpush1.msra.mxu0 %v866
            %876 = vmatprep.subr.mxu0 0.0
            %877 = vmatpush1.msra.mxu0 %v865
            %878 = vmatprep.subr.mxu0 0.0
            %879 = vmatpush1.msra.mxu0 %v864
            %880 = vmatprep.subr.mxu0 0.0
            %881 = vmatpush1.msra.mxu0 %v863
            %882 = vmatprep.subr.mxu0 0.0
            %883 = vmatpush1.msra.mxu0 %v862
            %884 = vmatprep.subr.mxu0 0.0
            %885 = vmatpush1.msra.mxu0 %v861
            %886 = vmatprep.subr.mxu0 0.0
            %887 = vmatpush1.msra.mxu0 %v860
            %888 = vmatprep.subr.mxu0 0.0
            %889 = vmatpush1.msra.mxu0 %v859
            %890 = vmatprep.subr.mxu0 0.0
            %891 = vmatpush1.msra.mxu0 %v858
            %892 = vmatprep.subr.mxu0 0.0
            %893 = vmatpush1.msra.mxu0 %v857
            %894 = vmatprep.subr.mxu0 0.0
            %895 = vmatpush1.msra.mxu0 %v856
            %896 = vmatprep.subr.mxu0 0.0
            %897 = vmatpush1.msra.mxu0 %v855
            %898 = vmatprep.subr.mxu0 0.0
            %899 = vmatpush1.msra.mxu0 %v854
            %900 = vmatprep.subr.mxu0 0.0
            %901 = vmatpush1.msra.mxu0 %v853
            %902 = vmatprep.subr.mxu0 0.0
            %903 = vmatpush1.msra.mxu0 %v852
            %904 = vmatprep.subr.mxu0 0.0
            %905 = vmatpush1.msra.mxu0 %v851
            %906 = vmatprep.subr.mxu0 0.0
            %907 = vmatpush2.msra.mxu0 0.0
            %908 = vmatprep.subr.mxu0 0.0
            %909 = vmatpush2.msra.mxu0 0.0
            %910 = vmatprep.subr.mxu0 0.0
            %911 = vmatpush2.msra.mxu0 0.0
            %912 = vmatprep.subr.mxu0 0.0
            %913 = vmatpush2.msra.mxu0 0.0
            %914 = vmatprep.subr.mxu0 0.0
            %915 = vmatpush2.msra.mxu0 0.0
            %916 = vmatprep.subr.mxu0 0.0
            %917 = vmatpush2.msra.mxu0 0.0
            %918 = vmatprep.subr.mxu0 0.0
            %919 = vmatpush2.msra.mxu0 0.0
            %920 = vmatprep.subr.mxu0 0.0
            %921 = vmatpush2.msra.mxu0 0.0
            %922 = vmatprep.subr.mxu0 0.0
            %923 = vmatpush2.msra.mxu0 0.0
            %924 = vmatprep.subr.mxu0 0.0
            %925 = vmatpush2.msra.mxu0 0.0
            %926 = vmatprep.subr.mxu0 0.0
            %927 = vmatpush2.msra.mxu0 0.0
            %928 = vmatprep.subr.mxu0 0.0
            %929 = vmatpush2.msra.mxu0 0.0
            %930 = vmatprep.subr.mxu0 0.0
            %931 = vmatpush2.msra.mxu0 0.0
            %932 = vmatprep.subr.mxu0 0.0
            %933 = vmatpush2.msra.mxu0 0.0
            %934 = vmatprep.subr.mxu0 0.0
            %935 = vmatpush2.msra.mxu0 0.0
            %936 = vmatprep.subr.mxu0 0.0
            %937 = vmatpush2.msra.mxu0 0.0
            %938 = vmatprep.mubr.f32.mxu0 0.0
            %939 = vmatmul.mubr.f32.gmra.mxu0 %v850
            %v940 = vpop.f32.mrf.mxu0
            %v941 = vadd.f32 %v872, %v940
            %v942 = vpop.f32.mrf.mxu0
            %943 = vdwg.mxu0
            %944 = vst [vmem:[#allocation4] sm:$0x1] %v941
          $region104: #{tpu_custom_call.1} parent=95 // pred_fallthru
            _
        $region96: #{tpu_custom_call.1} parent=63 // pred_fallthru
          _
        %p945 = scmp.eq.s32.totalorder %s39, 1
        // Predicated region
        $region105: #{tpu_custom_call.1} parent=63 // pred_check
          %p946 = pneg %p945
        $region106: #{tpu_custom_call.1} parent=63 // pred_check_branch
          %948 = sbr.rel (%p946) target = $region108
        $region107: #{tpu_custom_call.1} parent=63 // pred_region
          %s949 = smul.u32 %s40, 8
          %s950 = smul.addr %s949, 4
          %s951 = scalar_lea.vmem [#allocation2], %s950
          %v952 = vld [vmem:[%s951] sm:$0xf]
          %v953 = vld [vmem:[%s951 + $0x4] sm:$0xf]
          %v954 = vld [vmem:[%s951 + $0x8] sm:$0xf]
          %v955 = vld [vmem:[%s951 + $0xc] sm:$0xf]
          %v956 = vld [vmem:[%s951 + $0x10] sm:$0xf]
          %v957 = vld [vmem:[%s951 + $0x14] sm:$0xf]
          %v958 = vld [vmem:[%s951 + $0x18] sm:$0xf]
          %v959 = vld [vmem:[%s951 + $0x1c] sm:$0xf]
          %v960 = vld [vmem:[#allocation11] sm:$0xf]
          %v961 = vld [vmem:[#allocation11 + $0x4] sm:$0xf]
          %v962 = vld [vmem:[#allocation11 + $0x8] sm:$0xf]
          %v963 = vld [vmem:[#allocation11 + $0xc] sm:$0xf]
          %v964 = vld [vmem:[#allocation11 + $0x10] sm:$0xf]
          %v965 = vld [vmem:[#allocation11 + $0x14] sm:$0xf]
          %v966 = vld [vmem:[#allocation11 + $0x18] sm:$0xf]
          %v967 = vld [vmem:[#allocation11 + $0x1c] sm:$0xf]
          %v968 = vld [vmem:[#allocation11 + $0x20] sm:$0xf]
          %v969 = vld [vmem:[#allocation11 + $0x24] sm:$0xf]
          %v970 = vld [vmem:[#allocation11 + $0x28] sm:$0xf]
          %v971 = vld [vmem:[#allocation11 + $0x2c] sm:$0xf]
          %v972 = vld [vmem:[#allocation11 + $0x30] sm:$0xf]
          %v973 = vld [vmem:[#allocation11 + $0x34] sm:$0xf]
          %v974 = vld [vmem:[#allocation11 + $0x38] sm:$0xf]
          %v975 = vld [vmem:[#allocation11 + $0x3c] sm:$0xf]
          %v976 = vld [vmem:[%s4] sm:$0x1]
          %v978 = vlaneseq
          %v979 = vshrl.u32 %v978, 7
          %v980 = vsub.s32 0, %v979
          %v981 = vrot.slane %v976, %v980
          %v991 = vunpack.c.l.b16 %v952
          %v992 = vunpack.c.l.b16 %v953
          %v993 = vunpack.c.l.b16 %v954
          %v994 = vunpack.c.l.b16 %v955
          %v995 = vunpack.c.l.b16 %v956
          %v996 = vunpack.c.l.b16 %v957
          %v997 = vunpack.c.l.b16 %v958
          %v998 = vunpack.c.l.b16 %v959
          %v999 = vpack.c.b16 %v992, %v991
          %v1000 = vpack.c.b16 %v994, %v993
          %v1001 = vpack.c.b16 %v996, %v995
          %v1002 = vpack.c.b16 %v998, %v997
          %v1023 = vunpack.c.l.b16 %v960
          %v1024 = vunpack.c.l.b16 %v961
          %v1025 = vunpack.c.l.b16 %v962
          %v1026 = vunpack.c.l.b16 %v963
          %v1027 = vunpack.c.l.b16 %v964
          %v1028 = vunpack.c.l.b16 %v965
          %v1029 = vunpack.c.l.b16 %v966
          %v1030 = vunpack.c.l.b16 %v967
          %v1031 = vunpack.c.l.b16 %v968
          %v1032 = vunpack.c.l.b16 %v969
          %v1033 = vunpack.c.l.b16 %v970
          %v1034 = vunpack.c.l.b16 %v971
          %v1035 = vunpack.c.l.b16 %v972
          %v1036 = vunpack.c.l.b16 %v973
          %v1037 = vunpack.c.l.b16 %v974
          %v1038 = vunpack.c.l.b16 %v975
          %v1039 = vpack.c.b16 %v1024, %v1023
          %v1040 = vpack.c.b16 %v1026, %v1025
          %v1041 = vpack.c.b16 %v1028, %v1027
          %v1042 = vpack.c.b16 %v1030, %v1029
          %v1043 = vpack.c.b16 %v1032, %v1031
          %v1044 = vpack.c.b16 %v1034, %v1033
          %v1045 = vpack.c.b16 %v1036, %v1035
          %v1046 = vpack.c.b16 %v1038, %v1037
          %1055 = vmatprep.subr.bf16.mxu0 0
          %1056 = vmatpush1.bf16.msra.mxu0 %v1046
          %1057 = vmatprep.subr.bf16.mxu0 0
          %1058 = vmatpush1.bf16.msra.mxu0 %v1045
          %1059 = vmatprep.subr.bf16.mxu0 0
          %1060 = vmatpush1.bf16.msra.mxu0 %v1044
          %1061 = vmatprep.subr.bf16.mxu0 0
          %1062 = vmatpush1.bf16.msra.mxu0 %v1043
          %1063 = vmatprep.subr.bf16.mxu0 0
          %1064 = vmatpush1.bf16.msra.mxu0 %v1042
          %1065 = vmatprep.subr.bf16.mxu0 0
          %1066 = vmatpush1.bf16.msra.mxu0 %v1041
          %1067 = vmatprep.subr.bf16.mxu0 0
          %1068 = vmatpush1.bf16.msra.mxu0 %v1040
          %1069 = vmatprep.subr.bf16.mxu0 0
          %1070 = vmatpush1.bf16.msra.mxu0 %v1039
          %1071 = vmatprep.subr.bf16.mxu0 0
          %1072 = vmatpush2.bf16.msra.mxu0 0
          %1073 = vmatprep.subr.bf16.mxu0 0
          %1074 = vmatpush2.bf16.msra.mxu0 0
          %1075 = vmatprep.subr.bf16.mxu0 0
          %1076 = vmatpush2.bf16.msra.mxu0 0
          %1077 = vmatprep.subr.bf16.mxu0 0
          %1078 = vmatpush2.bf16.msra.mxu0 0
          %1079 = vmatprep.subr.bf16.mxu0 0
          %1080 = vmatpush2.bf16.msra.mxu0 0
          %1081 = vmatprep.subr.bf16.mxu0 0
          %1082 = vmatpush2.bf16.msra.mxu0 0
          %1083 = vmatprep.subr.bf16.mxu0 0
          %1084 = vmatpush2.bf16.msra.mxu0 0
          %1085 = vmatprep.subr.bf16.mxu0 0
          %1086 = vmatpush2.bf16.msra.mxu0 0
          %1087 = vmatprep.mubr.bf16.mxu0 0
          %1088 = vmatmul.mubr.bf16.gmra.mxu0 %v999
          %v1089 = vpop.f32.mrf.mxu0
          %v1090 = vadd.f32 %v981, %v1089
          %v1091 = vpop.f32.mrf.mxu0
          %v1092 = vpop.f32.mrf.mxu0
          %v1093 = vadd.f32 %v981, %v1092
          %v1094 = vpop.f32.mrf.mxu0
          %1095 = vmatprep.mubr.bf16.mxu0 0
          %1096 = vmatmul.mubr.bf16.gmra.mxu0 %v1000
          %v1097 = vpop.f32.mrf.mxu0
          %v1098 = vadd.f32 %v981, %v1097
          %v1099 = vpop.f32.mrf.mxu0
          %v1100 = vpop.f32.mrf.mxu0
          %v1101 = vadd.f32 %v981, %v1100
          %v1102 = vpop.f32.mrf.mxu0
          %1103 = vmatprep.mubr.bf16.mxu0 0
          %1104 = vmatmul.mubr.bf16.gmra.mxu0 %v1001
          %v1105 = vpop.f32.mrf.mxu0
          %v1106 = vadd.f32 %v981, %v1105
          %v1107 = vpop.f32.mrf.mxu0
          %v1108 = vpop.f32.mrf.mxu0
          %v1109 = vadd.f32 %v981, %v1108
          %v1110 = vpop.f32.mrf.mxu0
          %1111 = vmatprep.mubr.bf16.mxu0 0
          %1112 = vmatmul.mubr.bf16.gmra.mxu0 %v1002
          %v1113 = vpop.f32.mrf.mxu0
          %v1114 = vadd.f32 %v981, %v1113
          %v1115 = vpop.f32.mrf.mxu0
          %v1116 = vpop.f32.mrf.mxu0
          %v1117 = vadd.f32 %v981, %v1116
          %v1118 = vpop.f32.mrf.mxu0
          %1119 = vdwg.mxu0
          %v1120 = vmax.f32 %v1090, 0.0
          %v1121 = vmax.f32 %v1093, 0.0
          %v1122 = vmax.f32 %v1098, 0.0
          %v1123 = vmax.f32 %v1101, 0.0
          %v1124 = vmax.f32 %v1106, 0.0
          %v1125 = vmax.f32 %v1109, 0.0
          %v1126 = vmax.f32 %v1114, 0.0
          %v1127 = vmax.f32 %v1117, 0.0
          %v1128 = vpack.c.bf16 %v1121, %v1120
          %v1129 = vpack.c.bf16 %v1123, %v1122
          %v1130 = vpack.c.bf16 %v1125, %v1124
          %v1131 = vpack.c.bf16 %v1127, %v1126
          %v1132 = vld [vmem:[#allocation13] sm:$0xf]
          %v1133 = vld [vmem:[#allocation13 + $0x4] sm:$0xf]
          %v1134 = vld [vmem:[#allocation13 + $0x8] sm:$0xf]
          %v1135 = vld [vmem:[#allocation13 + $0xc] sm:$0xf]
          %v1136 = vld [vmem:[#allocation13 + $0x10] sm:$0xf]
          %v1137 = vld [vmem:[#allocation13 + $0x14] sm:$0xf]
          %v1138 = vld [vmem:[#allocation13 + $0x18] sm:$0xf]
          %v1139 = vld [vmem:[#allocation13 + $0x1c] sm:$0xf]
          %v1140 = vld [vmem:[#allocation13 + $0x20] sm:$0xf]
          %v1141 = vld [vmem:[#allocation13 + $0x24] sm:$0xf]
          %v1142 = vld [vmem:[#allocation13 + $0x28] sm:$0xf]
          %v1143 = vld [vmem:[#allocation13 + $0x2c] sm:$0xf]
          %v1144 = vld [vmem:[#allocation13 + $0x30] sm:$0xf]
          %v1145 = vld [vmem:[#allocation13 + $0x34] sm:$0xf]
          %v1146 = vld [vmem:[#allocation13 + $0x38] sm:$0xf]
          %v1147 = vld [vmem:[#allocation13 + $0x3c] sm:$0xf]
          %v1148 = vld [vmem:[%s6] sm:$0x1]
          %v1150 = vlaneseq
          %v1151 = vshrl.u32 %v1150, 7
          %v1152 = vsub.s32 0, %v1151
          %v1153 = vrot.slane %v1148, %v1152
          %v1171 = vunpack.c.l.b16 %v1132
          %v1172 = vunpack.c.l.b16 %v1133
          %v1173 = vunpack.c.l.b16 %v1134
          %v1174 = vunpack.c.l.b16 %v1135
          %v1175 = vunpack.c.l.b16 %v1136
          %v1176 = vunpack.c.l.b16 %v1137
          %v1177 = vunpack.c.l.b16 %v1138
          %v1178 = vunpack.c.l.b16 %v1139
          %v1179 = vunpack.c.l.b16 %v1140
          %v1180 = vunpack.c.l.b16 %v1141
          %v1181 = vunpack.c.l.b16 %v1142
          %v1182 = vunpack.c.l.b16 %v1143
          %v1183 = vunpack.c.l.b16 %v1144
          %v1184 = vunpack.c.l.b16 %v1145
          %v1185 = vunpack.c.l.b16 %v1146
          %v1186 = vunpack.c.l.b16 %v1147
          %v1187 = vpack.c.b16 %v1172, %v1171
          %v1188 = vpack.c.b16 %v1174, %v1173
          %v1189 = vpack.c.b16 %v1176, %v1175
          %v1190 = vpack.c.b16 %v1178, %v1177
          %v1191 = vpack.c.b16 %v1180, %v1179
          %v1192 = vpack.c.b16 %v1182, %v1181
          %v1193 = vpack.c.b16 %v1184, %v1183
          %v1194 = vpack.c.b16 %v1186, %v1185
          %1203 = vmatprep.subr.bf16.mxu0 0
          %1204 = vmatpush1.bf16.msra.mxu0 %v1194
          %1205 = vmatprep.subr.bf16.mxu0 0
          %1206 = vmatpush1.bf16.msra.mxu0 %v1193
          %1207 = vmatprep.subr.bf16.mxu0 0
          %1208 = vmatpush1.bf16.msra.mxu0 %v1192
          %1209 = vmatprep.subr.bf16.mxu0 0
          %1210 = vmatpush1.bf16.msra.mxu0 %v1191
          %1211 = vmatprep.subr.bf16.mxu0 0
          %1212 = vmatpush1.bf16.msra.mxu0 %v1190
          %1213 = vmatprep.subr.bf16.mxu0 0
          %1214 = vmatpush1.bf16.msra.mxu0 %v1189
          %1215 = vmatprep.subr.bf16.mxu0 0
          %1216 = vmatpush1.bf16.msra.mxu0 %v1188
          %1217 = vmatprep.subr.bf16.mxu0 0
          %1218 = vmatpush1.bf16.msra.mxu0 %v1187
          %1219 = vmatprep.subr.bf16.mxu0 0
          %1220 = vmatpush2.bf16.msra.mxu0 0
          %1221 = vmatprep.subr.bf16.mxu0 0
          %1222 = vmatpush2.bf16.msra.mxu0 0
          %1223 = vmatprep.subr.bf16.mxu0 0
          %1224 = vmatpush2.bf16.msra.mxu0 0
          %1225 = vmatprep.subr.bf16.mxu0 0
          %1226 = vmatpush2.bf16.msra.mxu0 0
          %1227 = vmatprep.subr.bf16.mxu0 0
          %1228 = vmatpush2.bf16.msra.mxu0 0
          %1229 = vmatprep.subr.bf16.mxu0 0
          %1230 = vmatpush2.bf16.msra.mxu0 0
          %1231 = vmatprep.subr.bf16.mxu0 0
          %1232 = vmatpush2.bf16.msra.mxu0 0
          %1233 = vmatprep.subr.bf16.mxu0 0
          %1234 = vmatpush2.bf16.msra.mxu0 0
          %1235 = vmatprep.mubr.bf16.mxu0 0
          %1236 = vmatmul.mubr.bf16.gmra.mxu0 %v1128
          %v1237 = vpop.f32.mrf.mxu0
          %v1238 = vadd.f32 %v1153, %v1237
          %v1239 = vpop.f32.mrf.mxu0
          %v1240 = vpop.f32.mrf.mxu0
          %v1241 = vadd.f32 %v1153, %v1240
          %v1242 = vpop.f32.mrf.mxu0
          %1243 = vmatprep.mubr.bf16.mxu0 0
          %1244 = vmatmul.mubr.bf16.gmra.mxu0 %v1129
          %v1245 = vpop.f32.mrf.mxu0
          %v1246 = vadd.f32 %v1153, %v1245
          %v1247 = vpop.f32.mrf.mxu0
          %v1248 = vpop.f32.mrf.mxu0
          %v1249 = vadd.f32 %v1153, %v1248
          %v1250 = vpop.f32.mrf.mxu0
          %1251 = vmatprep.mubr.bf16.mxu0 0
          %1252 = vmatmul.mubr.bf16.gmra.mxu0 %v1130
          %v1253 = vpop.f32.mrf.mxu0
          %v1254 = vadd.f32 %v1153, %v1253
          %v1255 = vpop.f32.mrf.mxu0
          %v1256 = vpop.f32.mrf.mxu0
          %v1257 = vadd.f32 %v1153, %v1256
          %v1258 = vpop.f32.mrf.mxu0
          %1259 = vmatprep.mubr.bf16.mxu0 0
          %1260 = vmatmul.mubr.bf16.gmra.mxu0 %v1131
          %v1261 = vpop.f32.mrf.mxu0
          %v1262 = vadd.f32 %v1153, %v1261
          %v1263 = vpop.f32.mrf.mxu0
          %v1264 = vpop.f32.mrf.mxu0
          %v1265 = vadd.f32 %v1153, %v1264
          %v1266 = vpop.f32.mrf.mxu0
          %1267 = vdwg.mxu0
          %v1268 = vld [vmem:[#allocation4] sm:$0x1]
          %v1270 = vlaneseq
          %v1271 = vshrl.u32 %v1270, 7
          %v1272 = vsub.s32 0, %v1271
          %v1273 = vrot.slane %v1268, %v1272
          %v1275 = vadd.f32 %v1238, %v1273
          %v1276 = vadd.f32 %v1241, %v1273
          %v1277 = vadd.f32 %v1246, %v1273
          %v1278 = vadd.f32 %v1249, %v1273
          %v1279 = vadd.f32 %v1254, %v1273
          %v1280 = vadd.f32 %v1257, %v1273
          %v1281 = vadd.f32 %v1262, %v1273
          %v1282 = vadd.f32 %v1265, %v1273
          %v1283 = vxor.u32 %v1275, 2147483648
          %v1284 = vxor.u32 %v1276, 2147483648
          %v1285 = vxor.u32 %v1277, 2147483648
          %v1286 = vxor.u32 %v1278, 2147483648
          %v1287 = vxor.u32 %v1279, 2147483648
          %v1288 = vxor.u32 %v1280, 2147483648
          %v1289 = vxor.u32 %v1281, 2147483648
          %v1290 = vxor.u32 %v1282, 2147483648
          %v1291 = vmul.f32 %v1283, 1.442695
          %v1292 = vpow.pop %v1291
          %v1293 = vmul.f32 %v1284, 1.442695
          %v1294 = vpow.pop %v1293
          %v1295 = vmul.f32 %v1285, 1.442695
          %v1296 = vpow.pop %v1295
          %v1297 = vmul.f32 %v1286, 1.442695
          %v1298 = vpow.pop %v1297
          %v1299 = vmul.f32 %v1287, 1.442695
          %v1300 = vpow.pop %v1299
          %v1301 = vmul.f32 %v1288, 1.442695
          %v1302 = vpow.pop %v1301
          %v1303 = vmul.f32 %v1289, 1.442695
          %v1304 = vpow.pop %v1303
          %v1305 = vmul.f32 %v1290, 1.442695
          %v1306 = vpow.pop %v1305
          %v1307 = vadd.f32 %v1292, 1.0
          %v1308 = vadd.f32 %v1294, 1.0
          %v1309 = vadd.f32 %v1296, 1.0
          %v1310 = vadd.f32 %v1298, 1.0
          %v1311 = vadd.f32 %v1300, 1.0
          %v1312 = vadd.f32 %v1302, 1.0
          %v1313 = vadd.f32 %v1304, 1.0
          %v1314 = vadd.f32 %v1306, 1.0
          %v1315 = vrcp.pop %v1307
          %v1316 = vmul.f32 1.0, %v1315
          %v1317 = vrcp.pop %v1308
          %v1318 = vmul.f32 1.0, %v1317
          %v1319 = vrcp.pop %v1309
          %v1320 = vmul.f32 1.0, %v1319
          %v1321 = vrcp.pop %v1310
          %v1322 = vmul.f32 1.0, %v1321
          %v1323 = vrcp.pop %v1311
          %v1324 = vmul.f32 1.0, %v1323
          %v1325 = vrcp.pop %v1312
          %v1326 = vmul.f32 1.0, %v1325
          %v1327 = vrcp.pop %v1313
          %v1328 = vmul.f32 1.0, %v1327
          %v1329 = vrcp.pop %v1314
          %v1330 = vmul.f32 1.0, %v1329
          %v1331 = vld [vmem:[%s525] sm:$0xf]
          %v1332 = vld [vmem:[%s525 + $0x4] sm:$0xf]
          %v1333 = vld [vmem:[%s525 + $0x8] sm:$0xf]
          %v1334 = vld [vmem:[%s525 + $0xc] sm:$0xf]
          %v1335 = vld [vmem:[%s525 + $0x10] sm:$0xf]
          %v1336 = vld [vmem:[%s525 + $0x14] sm:$0xf]
          %v1337 = vld [vmem:[%s525 + $0x18] sm:$0xf]
          %v1338 = vld [vmem:[%s525 + $0x1c] sm:$0xf]
          %v1339 = vunpack.c.l.bf16 %v1331
          %v1340 = vunpack.c.l.bf16 %v1332
          %v1341 = vunpack.c.l.bf16 %v1333
          %v1342 = vunpack.c.l.bf16 %v1334
          %v1343 = vunpack.c.l.bf16 %v1335
          %v1344 = vunpack.c.l.bf16 %v1336
          %v1345 = vunpack.c.l.bf16 %v1337
          %v1346 = vunpack.c.l.bf16 %v1338
          %v1347 = vunpack.c.l.bf16 %v952
          %v1348 = vunpack.c.l.bf16 %v953
          %v1349 = vunpack.c.l.bf16 %v954
          %v1350 = vunpack.c.l.bf16 %v955
          %v1351 = vunpack.c.l.bf16 %v956
          %v1352 = vunpack.c.l.bf16 %v957
          %v1353 = vunpack.c.l.bf16 %v958
          %v1354 = vunpack.c.l.bf16 %v959
          %v1355 = vmul.f32 %v1339, 2.0
          %v1356 = vmul.f32 %v1340, 2.0
          %v1357 = vmul.f32 %v1341, 2.0
          %v1358 = vmul.f32 %v1342, 2.0
          %v1359 = vmul.f32 %v1343, 2.0
          %v1360 = vmul.f32 %v1344, 2.0
          %v1361 = vmul.f32 %v1345, 2.0
          %v1362 = vmul.f32 %v1346, 2.0
          %v1363 = vsub.f32 %v1347, %v1355
          %v1364 = vsub.f32 %v1348, %v1356
          %v1365 = vsub.f32 %v1349, %v1357
          %v1366 = vsub.f32 %v1350, %v1358
          %v1367 = vsub.f32 %v1351, %v1359
          %v1368 = vsub.f32 %v1352, %v1360
          %v1369 = vsub.f32 %v1353, %v1361
          %v1370 = vsub.f32 %v1354, %v1362
          %v1371 = vmul.f32 %v1363, %v1316
          %v1372 = vmul.f32 %v1364, %v1318
          %v1373 = vmul.f32 %v1365, %v1320
          %v1374 = vmul.f32 %v1366, %v1322
          %v1375 = vmul.f32 %v1367, %v1324
          %v1376 = vmul.f32 %v1368, %v1326
          %v1377 = vmul.f32 %v1369, %v1328
          %v1378 = vmul.f32 %v1370, %v1330
          %v1379 = vadd.f32 %v1339, %v1371
          %v1380 = vadd.f32 %v1340, %v1372
          %v1381 = vadd.f32 %v1341, %v1373
          %v1382 = vadd.f32 %v1342, %v1374
          %v1383 = vadd.f32 %v1343, %v1375
          %v1384 = vadd.f32 %v1344, %v1376
          %v1385 = vadd.f32 %v1345, %v1377
          %v1386 = vadd.f32 %v1346, %v1378
          %v1387 = vpack.c.bf16 %v1380, %v1379
          %v1388 = vpack.c.bf16 %v1382, %v1381
          %v1389 = vpack.c.bf16 %v1384, %v1383
          %v1390 = vpack.c.bf16 %v1386, %v1385
          %v1395 = vunpack.c.l.b16 %v1387
          %v1396 = vunpack.c.h.b16 %v1387
          %v1397 = vunpack.c.l.b16 %v1388
          %v1398 = vunpack.c.h.b16 %v1388
          %v1399 = vunpack.c.l.b16 %v1389
          %v1400 = vunpack.c.h.b16 %v1389
          %v1401 = vunpack.c.l.b16 %v1390
          %v1402 = vunpack.c.h.b16 %v1390
          %v1403 = vpack.c.b16 %v1395, %v1395
          %v1404 = vpack.c.b16 %v1396, %v1396
          %v1405 = vpack.c.b16 %v1397, %v1397
          %v1406 = vpack.c.b16 %v1398, %v1398
          %v1407 = vpack.c.b16 %v1399, %v1399
          %v1408 = vpack.c.b16 %v1400, %v1400
          %v1409 = vpack.c.b16 %v1401, %v1401
          %v1410 = vpack.c.b16 %v1402, %v1402
          %1419 = vst [vmem:[%s598] sm:$0xf] %v1403
          %1420 = vst [vmem:[%s598 + $0x4] sm:$0xf] %v1404
          %1421 = vst [vmem:[%s598 + $0x8] sm:$0xf] %v1405
          %1422 = vst [vmem:[%s598 + $0xc] sm:$0xf] %v1406
          %1423 = vst [vmem:[%s598 + $0x10] sm:$0xf] %v1407
          %1424 = vst [vmem:[%s598 + $0x14] sm:$0xf] %v1408
          %1425 = vst [vmem:[%s598 + $0x18] sm:$0xf] %v1409
          %1426 = vst [vmem:[%s598 + $0x1c] sm:$0xf] %v1410
        $region108: #{tpu_custom_call.1} parent=63 // pred_fallthru
          _
        %s1427 = sand.u32 %s332, 1
        %s1428 = scalar_lea.sflag [#allocation7], %s1427
        %s1429 = sand.u32 %s332, 1
        %s1430 = smul.addr %s1429, 32
        %s1431 = scalar_lea.vmem [#allocation17], %s1430
        // Predicated region
        $region109: #{tpu_custom_call.1} parent=63 // pred_check
          %p1432 = pneg %p342
        $region110: #{tpu_custom_call.1} parent=63 // pred_check_branch
          %1434 = sbr.rel (%p1432) target = $region112
        $region111: #{tpu_custom_call.1} parent=63 // pred_region
          %s1435 = smul.u32 %s40, %s39
          %s1436 = smul.u32 8, %s1435
          %s1438 = ssub.s32 512, 512
          %1439 = vsyncadd %s1428, %s1438
          %s1440 = smul.addr %s38, 32
          %s1441 = sadd.s32 %s1436, %s1440
          %s1442 = smul.addr %s1441, 64
          %s1443 = scalar_lea.hbm %s11, %s1442
          %s1444 = sshll.u32 %s1431, 4
          %s1445 = int_to_ptr.vmem [resolvable:$true] %s1444
          %1450 = dma.vmem_to_hbm [thread:$0]  %s1445, 512, %s1443, %s1428, 64, 64, 4
        $region112: #{tpu_custom_call.1} parent=63 // pred_fallthru
          _
      $region64: #{tpu_custom_call.1} parent=5 // pred_fallthru
        _
      %p1451 = scmp.le.s32.totalorder 2, %s28
      // Predicated region
      $region113: #{tpu_custom_call.1} parent=5 // pred_check
        %p1452 = pneg %p1451
      $region114: #{tpu_custom_call.1} parent=5 // pred_check_branch
        %1454 = sbr.rel (%p1452) target = $region116
      $region115: #{tpu_custom_call.1} parent=5 // pred_region
        %s1455 = ssub.s32 %s28, 2
        // Predicated region
        $region117: #{tpu_custom_call.1} parent=115 // pred_check
          %p1456 = pneg %p348
        $region118: #{tpu_custom_call.1} parent=115 // pred_check_branch
          %1458 = sbr.rel (%p1456) target = $region120
        $region119: #{tpu_custom_call.1} parent=115 // pred_region
          %s1459 = sand.u32 %s333, 1
          %s1460 = scalar_lea.sflag [#allocation7], %s1459
          %s1461 = sand.u32 %s333, 1
          %s1462 = smul.addr %s1461, 32
          %s1463 = scalar_lea.vmem [#allocation17], %s1462
          %1464 = dma.done %s1460, 512
        $region120: #{tpu_custom_call.1} parent=115 // pred_fallthru
          _
      $region116: #{tpu_custom_call.1} parent=5 // pred_fallthru
        _
    $region6: #{tpu_custom_call.1} parent=1 // loop_footer
      %s32 = sadd.s32 1, %s28
    $region7: #{tpu_custom_call.1} parent=1 // loop_footer_branch
      %27 = sbr.rel target = $region3
    $region8: #{tpu_custom_call.1} parent=1 // loop_exit
      _
    %1465 = vsyncpa [#allocation6], 1
    %s1466 = scalar_lea.sflag [#allocation6], 1
    %1467 = vsyncpa %s1466, 1
    %1468 = vsyncpa [#allocation9], 1
    %s1469 = scalar_lea.sflag [#allocation9], 1
    %1470 = vsyncpa %s1469, 1
    %1471 = vsyncpa [#allocation12], 1
    %1472 = vsyncpa [#allocation15], 1
    %1473 = vsyncpa [#allocation7], 1
    %s1474 = scalar_lea.sflag [#allocation7], 1
    %1475 = vsyncpa %s1474, 1

</llo_original>
